<compile_context>
chip_gen: v6e
topology: v6e:2x2x1
jax: 0.10.0
libtpu: 0.0.40
codegen_flags: <defaults>
</compile_context>

<pallas_src>
import jax
import jax.numpy as jnp
from jax import lax
from jax.experimental import pallas as pl
from jax.experimental.pallas import tpu as pltpu

# ---- model hyperparameters (the PyTorch module's globals) ----
n_class = 32
emb_size = 16
n_hidden = 32


def _lstm_double_kernel(tok_ref,                 # SMEM (B, T) int32 token ids
                        eproj_ref,               # VMEM (n_class, 1, 4H) pre-projected emb table
                        w1h_ref,                 # VMEM (H, 4H)  layer-1 hidden->gates
                        w2h2_ref, w2h1_ref,      # VMEM (H, 4H), (H, 4H) layer-2 gates
                        b2_ref,                  # VMEM (1, 4H)
                        wo_ref, bo_ref,          # VMEM (H, C), (1, C) output projection
                        logits_ref,              # out (B, C)
                        state_ref):              # out (B, 4H) packed [h1 | h2 | c1 | c2]
    B, T = tok_ref.shape
    H = n_hidden
    G = 4 * H

    # ---- loop-invariant weight loads / bias broadcast (hoisted out of the loop) ----
    w1h = w1h_ref[...]
    w2h2 = w2h2_ref[...]
    w2h1 = w2h1_ref[...]
    b2 = jnp.broadcast_to(b2_ref[...], (B, G))

    zeros = jnp.zeros((B, H), jnp.float32)
    h1, c1, h2, c2 = zeros, zeros, zeros, zeros

    # Fully unrolled static recurrence; all state is in loop-carried vreg values.
    for t in range(T):
        # ---- layer 1: g1 = h1 @ w1h + E_proj[token_t]  (bias b1 folded into table) ----
        xc = jnp.concatenate(
            [eproj_ref[tok_ref[b, t]] for b in range(B)], axis=0)        # (B, 4H)
        g1 = jnp.dot(h1, w1h, preferred_element_type=jnp.float32) + xc
        s1 = jax.nn.sigmoid(g1)          # full (B, 4H=128) tile, one EUP pass
        t1 = jnp.tanh(g1)                # full (B, 4H=128) tile, one EUP pass
        c1 = s1[:, 0:H] * c1 + s1[:, H:2 * H] * t1[:, 2 * H:3 * H]
        h1 = s1[:, 3 * H:4 * H] * jnp.tanh(c1)

        # ---- layer 2: g2 = h2 @ w2h2 + h1_new @ w2h1 + b2 (two MXU pushes) ----
        g2 = (jnp.dot(h2, w2h2, preferred_element_type=jnp.float32)
              + jnp.dot(h1, w2h1, preferred_element_type=jnp.float32) + b2)
        s2 = jax.nn.sigmoid(g2)
        t2 = jnp.tanh(g2)
        c2 = s2[:, 0:H] * c2 + s2[:, H:2 * H] * t2[:, 2 * H:3 * H]
        h2 = s2[:, 3 * H:4 * H] * jnp.tanh(c2)

    # ---- final projection + packed lane-dense state writeback ----
    logits_ref[...] = (jnp.dot(h2, wo_ref[...],
                               preferred_element_type=jnp.float32)
                       + bo_ref[...])
    state_ref[...] = jnp.concatenate([h1, h2, c1, c2], axis=1)           # (B, 128), one store


def prepare_kernel_params(params):
    """One-time weight prep (NOT per forward call): fold emb @ w1x + b1 into a table."""
    H = n_hidden
    eproj = (params["emb"].astype(jnp.float32) @ params["w1x"]
             + params["b1"])                                             # (n_class, 4H)
    return {
        "eproj": eproj.reshape(n_class, 1, 4 * H),
        "w1h": params["w1h"],
        "w2h2": params["w2h2"],
        "w2h1": params["w2h1"],
        "b2": params["b2"],
        "wo": params["wo"],
        "bo": params["bo"],
    }


@jax.jit
def lstm_double_forward(tokens, kparams):
    """tokens: (B, T) int32.  kparams: prepare_kernel_params(...).
    Returns (logits, (h1, h2), (c1, c2))."""
    B, T = tokens.shape
    H, C = n_hidden, n_class

    vmem = pl.BlockSpec(memory_space=pltpu.MemorySpace.VMEM)
    smem = pl.BlockSpec(memory_space=pltpu.MemorySpace.SMEM)

    logits, state = pl.pallas_call(
        _lstm_double_kernel,
        out_shape=(
            jax.ShapeDtypeStruct((B, C), jnp.float32),        # logits
            jax.ShapeDtypeStruct((B, 4 * H), jnp.float32),    # packed [h1|h2|c1|c2]
        ),
        in_specs=[smem, vmem, vmem, vmem, vmem, vmem, vmem, vmem],
        out_specs=(vmem, vmem),
    )(tokens.astype(jnp.int32), kparams["eproj"], kparams["w1h"],
      kparams["w2h2"], kparams["w2h1"], kparams["b2"],
      kparams["wo"], kparams["bo"])

    h1 = state[:, 0 * H:1 * H]
    h2 = state[:, 1 * H:2 * H]
    c1 = state[:, 2 * H:3 * H]
    c2 = state[:, 3 * H:4 * H]
    return logits, (h1, h2), (c1, c2)


def init_params(key):
    """Deterministic parameter init (synthetic weights, not a checkpoint)."""
    H, E, C = n_hidden, emb_size, n_class
    ks = jax.random.split(key, 9)
    s = 0.1
    return {
        "emb":  jax.random.normal(ks[0], (C, E), jnp.float32) * s,
        # layer-1 gates packed [f, i, c, o] along the out dim
        "w1h":  jax.random.normal(ks[1], (H, 4 * H), jnp.float32) * s,
        "w1x":  jax.random.normal(ks[2], (E, 4 * H), jnp.float32) * s,
        "b1":   jax.random.normal(ks[3], (1, 4 * H), jnp.float32) * s,
        # layer-2 gates: cat([h2, h1]) split into h2-part and h1-part
        "w2h2": jax.random.normal(ks[4], (H, 4 * H), jnp.float32) * s,
        "w2h1": jax.random.normal(ks[5], (H, 4 * H), jnp.float32) * s,
        "b2":   jax.random.normal(ks[6], (1, 4 * H), jnp.float32) * s,
        "wo":   jax.random.normal(ks[7], (H, C), jnp.float32) * s,
        "bo":   jax.random.normal(ks[8], (1, C), jnp.float32) * s,
    }


def lstm_double_reference(tokens, params):
    """Pure-JAX reference mirroring the PyTorch forward (for validation)."""
    x = jnp.take(params["emb"], tokens, axis=0)
    x = jnp.transpose(x, (1, 0, 2)).astype(jnp.float32)  # (T, B, E)
    B = x.shape[1]
    H = n_hidden
    zero = jnp.zeros((B, H), jnp.float32)

    def step(carry, xt):
        h1, c1, h2, c2 = carry
        g1 = h1 @ params["w1h"] + xt @ params["w1x"] + params["b1"]
        f1 = jax.nn.sigmoid(g1[:, 0 * H:1 * H])
        i1 = jax.nn.sigmoid(g1[:, 1 * H:2 * H])
        cc1 = jnp.tanh(g1[:, 2 * H:3 * H])
        o1 = jax.nn.sigmoid(g1[:, 3 * H:4 * H])
        c1 = f1 * c1 + i1 * cc1
        h1 = o1 * jnp.tanh(c1)
        g2 = h2 @ params["w2h2"] + h1 @ params["w2h1"] + params["b2"]
        f2 = jax.nn.sigmoid(g2[:, 0 * H:1 * H])
        i2 = jax.nn.sigmoid(g2[:, 1 * H:2 * H])
        cc2 = jnp.tanh(g2[:, 2 * H:3 * H])
        o2 = jax.nn.sigmoid(g2[:, 3 * H:4 * H])
        c2 = f2 * c2 + i2 * cc2
        h2 = o2 * jnp.tanh(c2)
        return (h1, c1, h2, c2), None

    (h1, c1, h2, c2), _ = lax.scan(step, (zero, zero, zero, zero), x)
    logits = h2 @ params["wo"] + params["bo"]
    return logits, (h1, h2), (c1, c2)


if __name__ == "__main__":
    key = jax.random.PRNGKey(0)
    pkey, tkey = jax.random.split(key)
    params = init_params(pkey)
    kparams = prepare_kernel_params(params)   # one-time table/weight prep

    batch, seq_len = 2, 8
    tokens = jax.random.randint(tkey, (batch, seq_len), 0, n_class, dtype=jnp.int32)

    logits, (h1, h2), (c1, c2) = lstm_double_forward(tokens, kparams)
    jax.block_until_ready((logits, h1, h2, c1, c2))

    # sanity check against pure-JAX reference
    r_logits, (r_h1, r_h2), (r_c1, r_c2) = lstm_double_reference(tokens, params)
    assert jnp.allclose(logits, r_logits, atol=1e-5, rtol=1e-5)
    assert jnp.allclose(h1, r_h1, atol=1e-5, rtol=1e-5)
    assert jnp.allclose(h2, r_h2, atol=1e-5, rtol=1e-5)
    assert jnp.allclose(c1, r_c1, atol=1e-5, rtol=1e-5)
    assert jnp.allclose(c2, r_c2, atol=1e-5, rtol=1e-5)

    print("KERNEL_OK")
</pallas_src>

<mosaic_0001>
module attributes {stable_mosaic.version = 11 : i64} {
  func.func @_lstm_double_kernel(%arg0: memref<2x8xi32, #tpu.memory_space<smem>>, %arg1: memref<32x1x128xf32, #tpu.memory_space<vmem>>, %arg2: memref<32x128xf32, #tpu.memory_space<vmem>>, %arg3: memref<32x128xf32, #tpu.memory_space<vmem>>, %arg4: memref<32x128xf32, #tpu.memory_space<vmem>>, %arg5: memref<1x128xf32, #tpu.memory_space<vmem>>, %arg6: memref<32x32xf32, #tpu.memory_space<vmem>>, %arg7: memref<1x32xf32, #tpu.memory_space<vmem>>, %arg8: memref<2x32xf32, #tpu.memory_space<vmem>>, %arg9: memref<2x128xf32, #tpu.memory_space<vmem>>) attributes {dimension_semantics = [], scalar_prefetch = 0 : i64, scratch_operands = 0 : i64, tpu.core_type = #tpu.core_type<tc>} {
    %c0 = arith.constant 0 : index
    %c0_0 = arith.constant 0 : index
    %0 = vector.load %arg2[%c0, %c0_0] : memref<32x128xf32, #tpu.memory_space<vmem>>, vector<32x128xf32>
    %c0_1 = arith.constant 0 : index
    %c0_2 = arith.constant 0 : index
    %1 = vector.load %arg3[%c0_1, %c0_2] : memref<32x128xf32, #tpu.memory_space<vmem>>, vector<32x128xf32>
    %c0_3 = arith.constant 0 : index
    %c0_4 = arith.constant 0 : index
    %2 = vector.load %arg4[%c0_3, %c0_4] : memref<32x128xf32, #tpu.memory_space<vmem>>, vector<32x128xf32>
    %c0_5 = arith.constant 0 : index
    %c0_6 = arith.constant 0 : index
    %3 = vector.load %arg5[%c0_5, %c0_6] : memref<1x128xf32, #tpu.memory_space<vmem>>, vector<1x128xf32>
    %4 = vector.shape_cast %3 : vector<1x128xf32> to vector<1x128xf32>
    %5 = vector.broadcast %4 : vector<1x128xf32> to vector<2x128xf32>
    %cst = arith.constant 0.000000e+00 : f32
    %6 = vector.broadcast %cst : f32 to vector<2x32xf32>
    %c0_7 = arith.constant 0 : index
    %c0_8 = arith.constant 0 : index
    %7 = memref.load %arg0[%c0_7, %c0_8] : memref<2x8xi32, #tpu.memory_space<smem>>
    %8 = arith.index_cast %7 : i32 to index
    %c0_9 = arith.constant 0 : index
    %c0_10 = arith.constant 0 : index
    %9 = vector.load %arg1[%8, %c0_9, %c0_10] : memref<32x1x128xf32, #tpu.memory_space<vmem>>, vector<1x1x128xf32>
    %10 = vector.shape_cast %9 : vector<1x1x128xf32> to vector<1x128xf32>
    %c1 = arith.constant 1 : index
    %c0_11 = arith.constant 0 : index
    %11 = memref.load %arg0[%c1, %c0_11] : memref<2x8xi32, #tpu.memory_space<smem>>
    %12 = arith.index_cast %11 : i32 to index
    %c0_12 = arith.constant 0 : index
    %c0_13 = arith.constant 0 : index
    %13 = vector.load %arg1[%12, %c0_12, %c0_13] : memref<32x1x128xf32, #tpu.memory_space<vmem>>, vector<1x1x128xf32>
    %14 = vector.shape_cast %13 : vector<1x1x128xf32> to vector<1x128xf32>
    %15 = tpu.concatenate %10, %14 in 0 : vector<1x128xf32>, vector<1x128xf32> -> vector<2x128xf32>
    %cst_14 = arith.constant dense<0.000000e+00> : vector<2x128xf32>
    %16 = tpu.matmul %6, %0, %cst_14 {dimension_numbers = #tpu.dot_dimension_numbers<[1], [0], [0], [1], [0, 0, 1, 1], [], []>} : vector<2x32xf32>, vector<32x128xf32>, vector<2x128xf32> -> vector<2x128xf32>
    %17 = arith.addf %16, %15 : vector<2x128xf32>
    %18 = arith.negf %17 : vector<2x128xf32>
    %19 = math.exp %18 : vector<2x128xf32>
    %cst_15 = arith.constant 1.000000e+00 : f32
    %20 = vector.broadcast %cst_15 : f32 to vector<2x128xf32>
    %21 = arith.addf %20, %19 : vector<2x128xf32>
    %22 = arith.divf %20, %21 : vector<2x128xf32>
    %23 = math.tanh %17 : vector<2x128xf32>
    %24 = vector.extract_strided_slice %22 {offsets = [0, 0], sizes = [2, 32], strides = [1, 1]} : vector<2x128xf32> to vector<2x32xf32>
    %25 = arith.mulf %24, %6 : vector<2x32xf32>
    %26 = vector.extract_strided_slice %22 {offsets = [0, 32], sizes = [2, 32], strides = [1, 1]} : vector<2x128xf32> to vector<2x32xf32>
    %27 = vector.extract_strided_slice %23 {offsets = [0, 64], sizes = [2, 32], strides = [1, 1]} : vector<2x128xf32> to vector<2x32xf32>
    %28 = arith.mulf %26, %27 : vector<2x32xf32>
    %29 = arith.addf %25, %28 : vector<2x32xf32>
    %30 = vector.extract_strided_slice %22 {offsets = [0, 96], sizes = [2, 32], strides = [1, 1]} : vector<2x128xf32> to vector<2x32xf32>
    %31 = math.tanh %29 : vector<2x32xf32>
    %32 = arith.mulf %30, %31 : vector<2x32xf32>
    %cst_16 = arith.constant dense<0.000000e+00> : vector<2x128xf32>
    %33 = tpu.matmul %6, %1, %cst_16 {dimension_numbers = #tpu.dot_dimension_numbers<[1], [0], [0], [1], [0, 0, 1, 1], [], []>} : vector<2x32xf32>, vector<32x128xf32>, vector<2x128xf32> -> vector<2x128xf32>
    %cst_17 = arith.constant dense<0.000000e+00> : vector<2x128xf32>
    %34 = tpu.matmul %32, %2, %cst_17 {dimension_numbers = #tpu.dot_dimension_numbers<[1], [0], [0], [1], [0, 0, 1, 1], [], []>} : vector<2x32xf32>, vector<32x128xf32>, vector<2x128xf32> -> vector<2x128xf32>
    %35 = arith.addf %33, %34 : vector<2x128xf32>
    %36 = arith.addf %35, %5 : vector<2x128xf32>
    %37 = arith.negf %36 : vector<2x128xf32>
    %38 = math.exp %37 : vector<2x128xf32>
    %cst_18 = arith.constant 1.000000e+00 : f32
    %39 = vector.broadcast %cst_18 : f32 to vector<2x128xf32>
    %40 = arith.addf %39, %38 : vector<2x128xf32>
    %41 = arith.divf %39, %40 : vector<2x128xf32>
    %42 = math.tanh %36 : vector<2x128xf32>
    %43 = vector.extract_strided_slice %41 {offsets = [0, 0], sizes = [2, 32], strides = [1, 1]} : vector<2x128xf32> to vector<2x32xf32>
    %44 = arith.mulf %43, %6 : vector<2x32xf32>
    %45 = vector.extract_strided_slice %41 {offsets = [0, 32], sizes = [2, 32], strides = [1, 1]} : vector<2x128xf32> to vector<2x32xf32>
    %46 = vector.extract_strided_slice %42 {offsets = [0, 64], sizes = [2, 32], strides = [1, 1]} : vector<2x128xf32> to vector<2x32xf32>
    %47 = arith.mulf %45, %46 : vector<2x32xf32>
    %48 = arith.addf %44, %47 : vector<2x32xf32>
    %49 = vector.extract_strided_slice %41 {offsets = [0, 96], sizes = [2, 32], strides = [1, 1]} : vector<2x128xf32> to vector<2x32xf32>
    %50 = math.tanh %48 : vector<2x32xf32>
    %51 = arith.mulf %49, %50 : vector<2x32xf32>
    %c0_19 = arith.constant 0 : index
    %c1_20 = arith.constant 1 : index
    %52 = memref.load %arg0[%c0_19, %c1_20] : memref<2x8xi32, #tpu.memory_space<smem>>
    %53 = arith.index_cast %52 : i32 to index
    %c0_21 = arith.constant 0 : index
    %c0_22 = arith.constant 0 : index
    %54 = vector.load %arg1[%53, %c0_21, %c0_22] : memref<32x1x128xf32, #tpu.memory_space<vmem>>, vector<1x1x128xf32>
    %55 = vector.shape_cast %54 : vector<1x1x128xf32> to vector<1x128xf32>
    %c1_23 = arith.constant 1 : index
    %c1_24 = arith.constant 1 : index
    %56 = memref.load %arg0[%c1_23, %c1_24] : memref<2x8xi32, #tpu.memory_space<smem>>
    %57 = arith.index_cast %56 : i32 to index
    %c0_25 = arith.constant 0 : index
    %c0_26 = arith.constant 0 : index
    %58 = vector.load %arg1[%57, %c0_25, %c0_26] : memref<32x1x128xf32, #tpu.memory_space<vmem>>, vector<1x1x128xf32>
    %59 = vector.shape_cast %58 : vector<1x1x128xf32> to vector<1x128xf32>
    %60 = tpu.concatenate %55, %59 in 0 : vector<1x128xf32>, vector<1x128xf32> -> vector<2x128xf32>
    %cst_27 = arith.constant dense<0.000000e+00> : vector<2x128xf32>
    %61 = tpu.matmul %32, %0, %cst_27 {dimension_numbers = #tpu.dot_dimension_numbers<[1], [0], [0], [1], [0, 0, 1, 1], [], []>} : vector<2x32xf32>, vector<32x128xf32>, vector<2x128xf32> -> vector<2x128xf32>
    %62 = arith.addf %61, %60 : vector<2x128xf32>
    %63 = arith.negf %62 : vector<2x128xf32>
    %64 = math.exp %63 : vector<2x128xf32>
    %cst_28 = arith.constant 1.000000e+00 : f32
    %65 = vector.broadcast %cst_28 : f32 to vector<2x128xf32>
    %66 = arith.addf %65, %64 : vector<2x128xf32>
    %67 = arith.divf %65, %66 : vector<2x128xf32>
    %68 = math.tanh %62 : vector<2x128xf32>
    %69 = vector.extract_strided_slice %67 {offsets = [0, 0], sizes = [2, 32], strides = [1, 1]} : vector<2x128xf32> to vector<2x32xf32>
    %70 = arith.mulf %69, %29 : vector<2x32xf32>
    %71 = vector.extract_strided_slice %67 {offsets = [0, 32], sizes = [2, 32], strides = [1, 1]} : vector<2x128xf32> to vector<2x32xf32>
    %72 = vector.extract_strided_slice %68 {offsets = [0, 64], sizes = [2, 32], strides = [1, 1]} : vector<2x128xf32> to vector<2x32xf32>
    %73 = arith.mulf %71, %72 : vector<2x32xf32>
    %74 = arith.addf %70, %73 : vector<2x32xf32>
    %75 = vector.extract_strided_slice %67 {offsets = [0, 96], sizes = [2, 32], strides = [1, 1]} : vector<2x128xf32> to vector<2x32xf32>
    %76 = math.tanh %74 : vector<2x32xf32>
    %77 = arith.mulf %75, %76 : vector<2x32xf32>
    %cst_29 = arith.constant dense<0.000000e+00> : vector<2x128xf32>
    %78 = tpu.matmul %51, %1, %cst_29 {dimension_numbers = #tpu.dot_dimension_numbers<[1], [0], [0], [1], [0, 0, 1, 1], [], []>} : vector<2x32xf32>, vector<32x128xf32>, vector<2x128xf32> -> vector<2x128xf32>
    %cst_30 = arith.constant dense<0.000000e+00> : vector<2x128xf32>
    %79 = tpu.matmul %77, %2, %cst_30 {dimension_numbers = #tpu.dot_dimension_numbers<[1], [0], [0], [1], [0, 0, 1, 1], [], []>} : vector<2x32xf32>, vector<32x128xf32>, vector<2x128xf32> -> vector<2x128xf32>
    %80 = arith.addf %78, %79 : vector<2x128xf32>
    %81 = arith.addf %80, %5 : vector<2x128xf32>
    %82 = arith.negf %81 : vector<2x128xf32>
    %83 = math.exp %82 : vector<2x128xf32>
    %cst_31 = arith.constant 1.000000e+00 : f32
    %84 = vector.broadcast %cst_31 : f32 to vector<2x128xf32>
    %85 = arith.addf %84, %83 : vector<2x128xf32>
    %86 = arith.divf %84, %85 : vector<2x128xf32>
    %87 = math.tanh %81 : vector<2x128xf32>
    %88 = vector.extract_strided_slice %86 {offsets = [0, 0], sizes = [2, 32], strides = [1, 1]} : vector<2x128xf32> to vector<2x32xf32>
    %89 = arith.mulf %88, %48 : vector<2x32xf32>
    %90 = vector.extract_strided_slice %86 {offsets = [0, 32], sizes = [2, 32], strides = [1, 1]} : vector<2x128xf32> to vector<2x32xf32>
    %91 = vector.extract_strided_slice %87 {offsets = [0, 64], sizes = [2, 32], strides = [1, 1]} : vector<2x128xf32> to vector<2x32xf32>
    %92 = arith.mulf %90, %91 : vector<2x32xf32>
    %93 = arith.addf %89, %92 : vector<2x32xf32>
    %94 = vector.extract_strided_slice %86 {offsets = [0, 96], sizes = [2, 32], strides = [1, 1]} : vector<2x128xf32> to vector<2x32xf32>
    %95 = math.tanh %93 : vector<2x32xf32>
    %96 = arith.mulf %94, %95 : vector<2x32xf32>
    %c0_32 = arith.constant 0 : index
    %c2 = arith.constant 2 : index
    %97 = memref.load %arg0[%c0_32, %c2] : memref<2x8xi32, #tpu.memory_space<smem>>
    %98 = arith.index_cast %97 : i32 to index
    %c0_33 = arith.constant 0 : index
    %c0_34 = arith.constant 0 : index
    %99 = vector.load %arg1[%98, %c0_33, %c0_34] : memref<32x1x128xf32, #tpu.memory_space<vmem>>, vector<1x1x128xf32>
    %100 = vector.shape_cast %99 : vector<1x1x128xf32> to vector<1x128xf32>
    %c1_35 = arith.constant 1 : index
    %c2_36 = arith.constant 2 : index
    %101 = memref.load %arg0[%c1_35, %c2_36] : memref<2x8xi32, #tpu.memory_space<smem>>
    %102 = arith.index_cast %101 : i32 to index
    %c0_37 = arith.constant 0 : index
    %c0_38 = arith.constant 0 : index
    %103 = vector.load %arg1[%102, %c0_37, %c0_38] : memref<32x1x128xf32, #tpu.memory_space<vmem>>, vector<1x1x128xf32>
    %104 = vector.shape_cast %103 : vector<1x1x128xf32> to vector<1x128xf32>
    %105 = tpu.concatenate %100, %104 in 0 : vector<1x128xf32>, vector<1x128xf32> -> vector<2x128xf32>
    %cst_39 = arith.constant dense<0.000000e+00> : vector<2x128xf32>
    %106 = tpu.matmul %77, %0, %cst_39 {dimension_numbers = #tpu.dot_dimension_numbers<[1], [0], [0], [1], [0, 0, 1, 1], [], []>} : vector<2x32xf32>, vector<32x128xf32>, vector<2x128xf32> -> vector<2x128xf32>
    %107 = arith.addf %106, %105 : vector<2x128xf32>
    %108 = arith.negf %107 : vector<2x128xf32>
    %109 = math.exp %108 : vector<2x128xf32>
    %cst_40 = arith.constant 1.000000e+00 : f32
    %110 = vector.broadcast %cst_40 : f32 to vector<2x128xf32>
    %111 = arith.addf %110, %109 : vector<2x128xf32>
    %112 = arith.divf %110, %111 : vector<2x128xf32>
    %113 = math.tanh %107 : vector<2x128xf32>
    %114 = vector.extract_strided_slice %112 {offsets = [0, 0], sizes = [2, 32], strides = [1, 1]} : vector<2x128xf32> to vector<2x32xf32>
    %115 = arith.mulf %114, %74 : vector<2x32xf32>
    %116 = vector.extract_strided_slice %112 {offsets = [0, 32], sizes = [2, 32], strides = [1, 1]} : vector<2x128xf32> to vector<2x32xf32>
    %117 = vector.extract_strided_slice %113 {offsets = [0, 64], sizes = [2, 32], strides = [1, 1]} : vector<2x128xf32> to vector<2x32xf32>
    %118 = arith.mulf %116, %117 : vector<2x32xf32>
    %119 = arith.addf %115, %118 : vector<2x32xf32>
    %120 = vector.extract_strided_slice %112 {offsets = [0, 96], sizes = [2, 32], strides = [1, 1]} : vector<2x128xf32> to vector<2x32xf32>
    %121 = math.tanh %119 : vector<2x32xf32>
    %122 = arith.mulf %120, %121 : vector<2x32xf32>
    %cst_41 = arith.constant dense<0.000000e+00> : vector<2x128xf32>
    %123 = tpu.matmul %96, %1, %cst_41 {dimension_numbers = #tpu.dot_dimension_numbers<[1], [0], [0], [1], [0, 0, 1, 1], [], []>} : vector<2x32xf32>, vector<32x128xf32>, vector<2x128xf32> -> vector<2x128xf32>
    %cst_42 = arith.constant dense<0.000000e+00> : vector<2x128xf32>
    %124 = tpu.matmul %122, %2, %cst_42 {dimension_numbers = #tpu.dot_dimension_numbers<[1], [0], [0], [1], [0, 0, 1, 1], [], []>} : vector<2x32xf32>, vector<32x128xf32>, vector<2x128xf32> -> vector<2x128xf32>
    %125 = arith.addf %123, %124 : vector<2x128xf32>
    %126 = arith.addf %125, %5 : vector<2x128xf32>
    %127 = arith.negf %126 : vector<2x128xf32>
    %128 = math.exp %127 : vector<2x128xf32>
    %cst_43 = arith.constant 1.000000e+00 : f32
    %129 = vector.broadcast %cst_43 : f32 to vector<2x128xf32>
    %130 = arith.addf %129, %128 : vector<2x128xf32>
    %131 = arith.divf %129, %130 : vector<2x128xf32>
    %132 = math.tanh %126 : vector<2x128xf32>
    %133 = vector.extract_strided_slice %131 {offsets = [0, 0], sizes = [2, 32], strides = [1, 1]} : vector<2x128xf32> to vector<2x32xf32>
    %134 = arith.mulf %133, %93 : vector<2x32xf32>
    %135 = vector.extract_strided_slice %131 {offsets = [0, 32], sizes = [2, 32], strides = [1, 1]} : vector<2x128xf32> to vector<2x32xf32>
    %136 = vector.extract_strided_slice %132 {offsets = [0, 64], sizes = [2, 32], strides = [1, 1]} : vector<2x128xf32> to vector<2x32xf32>
    %137 = arith.mulf %135, %136 : vector<2x32xf32>
    %138 = arith.addf %134, %137 : vector<2x32xf32>
    %139 = vector.extract_strided_slice %131 {offsets = [0, 96], sizes = [2, 32], strides = [1, 1]} : vector<2x128xf32> to vector<2x32xf32>
    %140 = math.tanh %138 : vector<2x32xf32>
    %141 = arith.mulf %139, %140 : vector<2x32xf32>
    %c0_44 = arith.constant 0 : index
    %c3 = arith.constant 3 : index
    %142 = memref.load %arg0[%c0_44, %c3] : memref<2x8xi32, #tpu.memory_space<smem>>
    %143 = arith.index_cast %142 : i32 to index
    %c0_45 = arith.constant 0 : index
    %c0_46 = arith.constant 0 : index
    %144 = vector.load %arg1[%143, %c0_45, %c0_46] : memref<32x1x128xf32, #tpu.memory_space<vmem>>, vector<1x1x128xf32>
    %145 = vector.shape_cast %144 : vector<1x1x128xf32> to vector<1x128xf32>
    %c1_47 = arith.constant 1 : index
    %c3_48 = arith.constant 3 : index
    %146 = memref.load %arg0[%c1_47, %c3_48] : memref<2x8xi32, #tpu.memory_space<smem>>
    %147 = arith.index_cast %146 : i32 to index
    %c0_49 = arith.constant 0 : index
    %c0_50 = arith.constant 0 : index
    %148 = vector.load %arg1[%147, %c0_49, %c0_50] : memref<32x1x128xf32, #tpu.memory_space<vmem>>, vector<1x1x128xf32>
    %149 = vector.shape_cast %148 : vector<1x1x128xf32> to vector<1x128xf32>
    %150 = tpu.concatenate %145, %149 in 0 : vector<1x128xf32>, vector<1x128xf32> -> vector<2x128xf32>
    %cst_51 = arith.constant dense<0.000000e+00> : vector<2x128xf32>
    %151 = tpu.matmul %122, %0, %cst_51 {dimension_numbers = #tpu.dot_dimension_numbers<[1], [0], [0], [1], [0, 0, 1, 1], [], []>} : vector<2x32xf32>, vector<32x128xf32>, vector<2x128xf32> -> vector<2x128xf32>
    %152 = arith.addf %151, %150 : vector<2x128xf32>
    %153 = arith.negf %152 : vector<2x128xf32>
    %154 = math.exp %153 : vector<2x128xf32>
    %cst_52 = arith.constant 1.000000e+00 : f32
    %155 = vector.broadcast %cst_52 : f32 to vector<2x128xf32>
    %156 = arith.addf %155, %154 : vector<2x128xf32>
    %157 = arith.divf %155, %156 : vector<2x128xf32>
    %158 = math.tanh %152 : vector<2x128xf32>
    %159 = vector.extract_strided_slice %157 {offsets = [0, 0], sizes = [2, 32], strides = [1, 1]} : vector<2x128xf32> to vector<2x32xf32>
    %160 = arith.mulf %159, %119 : vector<2x32xf32>
    %161 = vector.extract_strided_slice %157 {offsets = [0, 32], sizes = [2, 32], strides = [1, 1]} : vector<2x128xf32> to vector<2x32xf32>
    %162 = vector.extract_strided_slice %158 {offsets = [0, 64], sizes = [2, 32], strides = [1, 1]} : vector<2x128xf32> to vector<2x32xf32>
    %163 = arith.mulf %161, %162 : vector<2x32xf32>
    %164 = arith.addf %160, %163 : vector<2x32xf32>
    %165 = vector.extract_strided_slice %157 {offsets = [0, 96], sizes = [2, 32], strides = [1, 1]} : vector<2x128xf32> to vector<2x32xf32>
    %166 = math.tanh %164 : vector<2x32xf32>
    %167 = arith.mulf %165, %166 : vector<2x32xf32>
    %cst_53 = arith.constant dense<0.000000e+00> : vector<2x128xf32>
    %168 = tpu.matmul %141, %1, %cst_53 {dimension_numbers = #tpu.dot_dimension_numbers<[1], [0], [0], [1], [0, 0, 1, 1], [], []>} : vector<2x32xf32>, vector<32x128xf32>, vector<2x128xf32> -> vector<2x128xf32>
    %cst_54 = arith.constant dense<0.000000e+00> : vector<2x128xf32>
    %169 = tpu.matmul %167, %2, %cst_54 {dimension_numbers = #tpu.dot_dimension_numbers<[1], [0], [0], [1], [0, 0, 1, 1], [], []>} : vector<2x32xf32>, vector<32x128xf32>, vector<2x128xf32> -> vector<2x128xf32>
    %170 = arith.addf %168, %169 : vector<2x128xf32>
    %171 = arith.addf %170, %5 : vector<2x128xf32>
    %172 = arith.negf %171 : vector<2x128xf32>
    %173 = math.exp %172 : vector<2x128xf32>
    %cst_55 = arith.constant 1.000000e+00 : f32
    %174 = vector.broadcast %cst_55 : f32 to vector<2x128xf32>
    %175 = arith.addf %174, %173 : vector<2x128xf32>
    %176 = arith.divf %174, %175 : vector<2x128xf32>
    %177 = math.tanh %171 : vector<2x128xf32>
    %178 = vector.extract_strided_slice %176 {offsets = [0, 0], sizes = [2, 32], strides = [1, 1]} : vector<2x128xf32> to vector<2x32xf32>
    %179 = arith.mulf %178, %138 : vector<2x32xf32>
    %180 = vector.extract_strided_slice %176 {offsets = [0, 32], sizes = [2, 32], strides = [1, 1]} : vector<2x128xf32> to vector<2x32xf32>
    %181 = vector.extract_strided_slice %177 {offsets = [0, 64], sizes = [2, 32], strides = [1, 1]} : vector<2x128xf32> to vector<2x32xf32>
    %182 = arith.mulf %180, %181 : vector<2x32xf32>
    %183 = arith.addf %179, %182 : vector<2x32xf32>
    %184 = vector.extract_strided_slice %176 {offsets = [0, 96], sizes = [2, 32], strides = [1, 1]} : vector<2x128xf32> to vector<2x32xf32>
    %185 = math.tanh %183 : vector<2x32xf32>
    %186 = arith.mulf %184, %185 : vector<2x32xf32>
    %c0_56 = arith.constant 0 : index
    %c4 = arith.constant 4 : index
    %187 = memref.load %arg0[%c0_56, %c4] : memref<2x8xi32, #tpu.memory_space<smem>>
    %188 = arith.index_cast %187 : i32 to index
    %c0_57 = arith.constant 0 : index
    %c0_58 = arith.constant 0 : index
    %189 = vector.load %arg1[%188, %c0_57, %c0_58] : memref<32x1x128xf32, #tpu.memory_space<vmem>>, vector<1x1x128xf32>
    %190 = vector.shape_cast %189 : vector<1x1x128xf32> to vector<1x128xf32>
    %c1_59 = arith.constant 1 : index
    %c4_60 = arith.constant 4 : index
    %191 = memref.load %arg0[%c1_59, %c4_60] : memref<2x8xi32, #tpu.memory_space<smem>>
    %192 = arith.index_cast %191 : i32 to index
    %c0_61 = arith.constant 0 : index
    %c0_62 = arith.constant 0 : index
    %193 = vector.load %arg1[%192, %c0_61, %c0_62] : memref<32x1x128xf32, #tpu.memory_space<vmem>>, vector<1x1x128xf32>
    %194 = vector.shape_cast %193 : vector<1x1x128xf32> to vector<1x128xf32>
    %195 = tpu.concatenate %190, %194 in 0 : vector<1x128xf32>, vector<1x128xf32> -> vector<2x128xf32>
    %cst_63 = arith.constant dense<0.000000e+00> : vector<2x128xf32>
    %196 = tpu.matmul %167, %0, %cst_63 {dimension_numbers = #tpu.dot_dimension_numbers<[1], [0], [0], [1], [0, 0, 1, 1], [], []>} : vector<2x32xf32>, vector<32x128xf32>, vector<2x128xf32> -> vector<2x128xf32>
    %197 = arith.addf %196, %195 : vector<2x128xf32>
    %198 = arith.negf %197 : vector<2x128xf32>
    %199 = math.exp %198 : vector<2x128xf32>
    %cst_64 = arith.constant 1.000000e+00 : f32
    %200 = vector.broadcast %cst_64 : f32 to vector<2x128xf32>
    %201 = arith.addf %200, %199 : vector<2x128xf32>
    %202 = arith.divf %200, %201 : vector<2x128xf32>
    %203 = math.tanh %197 : vector<2x128xf32>
    %204 = vector.extract_strided_slice %202 {offsets = [0, 0], sizes = [2, 32], strides = [1, 1]} : vector<2x128xf32> to vector<2x32xf32>
    %205 = arith.mulf %204, %164 : vector<2x32xf32>
    %206 = vector.extract_strided_slice %202 {offsets = [0, 32], sizes = [2, 32], strides = [1, 1]} : vector<2x128xf32> to vector<2x32xf32>
    %207 = vector.extract_strided_slice %203 {offsets = [0, 64], sizes = [2, 32], strides = [1, 1]} : vector<2x128xf32> to vector<2x32xf32>
    %208 = arith.mulf %206, %207 : vector<2x32xf32>
    %209 = arith.addf %205, %208 : vector<2x32xf32>
    %210 = vector.extract_strided_slice %202 {offsets = [0, 96], sizes = [2, 32], strides = [1, 1]} : vector<2x128xf32> to vector<2x32xf32>
    %211 = math.tanh %209 : vector<2x32xf32>
    %212 = arith.mulf %210, %211 : vector<2x32xf32>
    %cst_65 = arith.constant dense<0.000000e+00> : vector<2x128xf32>
    %213 = tpu.matmul %186, %1, %cst_65 {dimension_numbers = #tpu.dot_dimension_numbers<[1], [0], [0], [1], [0, 0, 1, 1], [], []>} : vector<2x32xf32>, vector<32x128xf32>, vector<2x128xf32> -> vector<2x128xf32>
    %cst_66 = arith.constant dense<0.000000e+00> : vector<2x128xf32>
    %214 = tpu.matmul %212, %2, %cst_66 {dimension_numbers = #tpu.dot_dimension_numbers<[1], [0], [0], [1], [0, 0, 1, 1], [], []>} : vector<2x32xf32>, vector<32x128xf32>, vector<2x128xf32> -> vector<2x128xf32>
    %215 = arith.addf %213, %214 : vector<2x128xf32>
    %216 = arith.addf %215, %5 : vector<2x128xf32>
    %217 = arith.negf %216 : vector<2x128xf32>
    %218 = math.exp %217 : vector<2x128xf32>
    %cst_67 = arith.constant 1.000000e+00 : f32
    %219 = vector.broadcast %cst_67 : f32 to vector<2x128xf32>
    %220 = arith.addf %219, %218 : vector<2x128xf32>
    %221 = arith.divf %219, %220 : vector<2x128xf32>
    %222 = math.tanh %216 : vector<2x128xf32>
    %223 = vector.extract_strided_slice %221 {offsets = [0, 0], sizes = [2, 32], strides = [1, 1]} : vector<2x128xf32> to vector<2x32xf32>
    %224 = arith.mulf %223, %183 : vector<2x32xf32>
    %225 = vector.extract_strided_slice %221 {offsets = [0, 32], sizes = [2, 32], strides = [1, 1]} : vector<2x128xf32> to vector<2x32xf32>
    %226 = vector.extract_strided_slice %222 {offsets = [0, 64], sizes = [2, 32], strides = [1, 1]} : vector<2x128xf32> to vector<2x32xf32>
    %227 = arith.mulf %225, %226 : vector<2x32xf32>
    %228 = arith.addf %224, %227 : vector<2x32xf32>
    %229 = vector.extract_strided_slice %221 {offsets = [0, 96], sizes = [2, 32], strides = [1, 1]} : vector<2x128xf32> to vector<2x32xf32>
    %230 = math.tanh %228 : vector<2x32xf32>
    %231 = arith.mulf %229, %230 : vector<2x32xf32>
    %c0_68 = arith.constant 0 : index
    %c5 = arith.constant 5 : index
    %232 = memref.load %arg0[%c0_68, %c5] : memref<2x8xi32, #tpu.memory_space<smem>>
    %233 = arith.index_cast %232 : i32 to index
    %c0_69 = arith.constant 0 : index
    %c0_70 = arith.constant 0 : index
    %234 = vector.load %arg1[%233, %c0_69, %c0_70] : memref<32x1x128xf32, #tpu.memory_space<vmem>>, vector<1x1x128xf32>
    %235 = vector.shape_cast %234 : vector<1x1x128xf32> to vector<1x128xf32>
    %c1_71 = arith.constant 1 : index
    %c5_72 = arith.constant 5 : index
    %236 = memref.load %arg0[%c1_71, %c5_72] : memref<2x8xi32, #tpu.memory_space<smem>>
    %237 = arith.index_cast %236 : i32 to index
    %c0_73 = arith.constant 0 : index
    %c0_74 = arith.constant 0 : index
    %238 = vector.load %arg1[%237, %c0_73, %c0_74] : memref<32x1x128xf32, #tpu.memory_space<vmem>>, vector<1x1x128xf32>
    %239 = vector.shape_cast %238 : vector<1x1x128xf32> to vector<1x128xf32>
    %240 = tpu.concatenate %235, %239 in 0 : vector<1x128xf32>, vector<1x128xf32> -> vector<2x128xf32>
    %cst_75 = arith.constant dense<0.000000e+00> : vector<2x128xf32>
    %241 = tpu.matmul %212, %0, %cst_75 {dimension_numbers = #tpu.dot_dimension_numbers<[1], [0], [0], [1], [0, 0, 1, 1], [], []>} : vector<2x32xf32>, vector<32x128xf32>, vector<2x128xf32> -> vector<2x128xf32>
    %242 = arith.addf %241, %240 : vector<2x128xf32>
    %243 = arith.negf %242 : vector<2x128xf32>
    %244 = math.exp %243 : vector<2x128xf32>
    %cst_76 = arith.constant 1.000000e+00 : f32
    %245 = vector.broadcast %cst_76 : f32 to vector<2x128xf32>
    %246 = arith.addf %245, %244 : vector<2x128xf32>
    %247 = arith.divf %245, %246 : vector<2x128xf32>
    %248 = math.tanh %242 : vector<2x128xf32>
    %249 = vector.extract_strided_slice %247 {offsets = [0, 0], sizes = [2, 32], strides = [1, 1]} : vector<2x128xf32> to vector<2x32xf32>
    %250 = arith.mulf %249, %209 : vector<2x32xf32>
    %251 = vector.extract_strided_slice %247 {offsets = [0, 32], sizes = [2, 32], strides = [1, 1]} : vector<2x128xf32> to vector<2x32xf32>
    %252 = vector.extract_strided_slice %248 {offsets = [0, 64], sizes = [2, 32], strides = [1, 1]} : vector<2x128xf32> to vector<2x32xf32>
    %253 = arith.mulf %251, %252 : vector<2x32xf32>
    %254 = arith.addf %250, %253 : vector<2x32xf32>
    %255 = vector.extract_strided_slice %247 {offsets = [0, 96], sizes = [2, 32], strides = [1, 1]} : vector<2x128xf32> to vector<2x32xf32>
    %256 = math.tanh %254 : vector<2x32xf32>
    %257 = arith.mulf %255, %256 : vector<2x32xf32>
    %cst_77 = arith.constant dense<0.000000e+00> : vector<2x128xf32>
    %258 = tpu.matmul %231, %1, %cst_77 {dimension_numbers = #tpu.dot_dimension_numbers<[1], [0], [0], [1], [0, 0, 1, 1], [], []>} : vector<2x32xf32>, vector<32x128xf32>, vector<2x128xf32> -> vector<2x128xf32>
    %cst_78 = arith.constant dense<0.000000e+00> : vector<2x128xf32>
    %259 = tpu.matmul %257, %2, %cst_78 {dimension_numbers = #tpu.dot_dimension_numbers<[1], [0], [0], [1], [0, 0, 1, 1], [], []>} : vector<2x32xf32>, vector<32x128xf32>, vector<2x128xf32> -> vector<2x128xf32>
    %260 = arith.addf %258, %259 : vector<2x128xf32>
    %261 = arith.addf %260, %5 : vector<2x128xf32>
    %262 = arith.negf %261 : vector<2x128xf32>
    %263 = math.exp %262 : vector<2x128xf32>
    %cst_79 = arith.constant 1.000000e+00 : f32
    %264 = vector.broadcast %cst_79 : f32 to vector<2x128xf32>
    %265 = arith.addf %264, %263 : vector<2x128xf32>
    %266 = arith.divf %264, %265 : vector<2x128xf32>
    %267 = math.tanh %261 : vector<2x128xf32>
    %268 = vector.extract_strided_slice %266 {offsets = [0, 0], sizes = [2, 32], strides = [1, 1]} : vector<2x128xf32> to vector<2x32xf32>
    %269 = arith.mulf %268, %228 : vector<2x32xf32>
    %270 = vector.extract_strided_slice %266 {offsets = [0, 32], sizes = [2, 32], strides = [1, 1]} : vector<2x128xf32> to vector<2x32xf32>
    %271 = vector.extract_strided_slice %267 {offsets = [0, 64], sizes = [2, 32], strides = [1, 1]} : vector<2x128xf32> to vector<2x32xf32>
    %272 = arith.mulf %270, %271 : vector<2x32xf32>
    %273 = arith.addf %269, %272 : vector<2x32xf32>
    %274 = vector.extract_strided_slice %266 {offsets = [0, 96], sizes = [2, 32], strides = [1, 1]} : vector<2x128xf32> to vector<2x32xf32>
    %275 = math.tanh %273 : vector<2x32xf32>
    %276 = arith.mulf %274, %275 : vector<2x32xf32>
    %c0_80 = arith.constant 0 : index
    %c6 = arith.constant 6 : index
    %277 = memref.load %arg0[%c0_80, %c6] : memref<2x8xi32, #tpu.memory_space<smem>>
    %278 = arith.index_cast %277 : i32 to index
    %c0_81 = arith.constant 0 : index
    %c0_82 = arith.constant 0 : index
    %279 = vector.load %arg1[%278, %c0_81, %c0_82] : memref<32x1x128xf32, #tpu.memory_space<vmem>>, vector<1x1x128xf32>
    %280 = vector.shape_cast %279 : vector<1x1x128xf32> to vector<1x128xf32>
    %c1_83 = arith.constant 1 : index
    %c6_84 = arith.constant 6 : index
    %281 = memref.load %arg0[%c1_83, %c6_84] : memref<2x8xi32, #tpu.memory_space<smem>>
    %282 = arith.index_cast %281 : i32 to index
    %c0_85 = arith.constant 0 : index
    %c0_86 = arith.constant 0 : index
    %283 = vector.load %arg1[%282, %c0_85, %c0_86] : memref<32x1x128xf32, #tpu.memory_space<vmem>>, vector<1x1x128xf32>
    %284 = vector.shape_cast %283 : vector<1x1x128xf32> to vector<1x128xf32>
    %285 = tpu.concatenate %280, %284 in 0 : vector<1x128xf32>, vector<1x128xf32> -> vector<2x128xf32>
    %cst_87 = arith.constant dense<0.000000e+00> : vector<2x128xf32>
    %286 = tpu.matmul %257, %0, %cst_87 {dimension_numbers = #tpu.dot_dimension_numbers<[1], [0], [0], [1], [0, 0, 1, 1], [], []>} : vector<2x32xf32>, vector<32x128xf32>, vector<2x128xf32> -> vector<2x128xf32>
    %287 = arith.addf %286, %285 : vector<2x128xf32>
    %288 = arith.negf %287 : vector<2x128xf32>
    %289 = math.exp %288 : vector<2x128xf32>
    %cst_88 = arith.constant 1.000000e+00 : f32
    %290 = vector.broadcast %cst_88 : f32 to vector<2x128xf32>
    %291 = arith.addf %290, %289 : vector<2x128xf32>
    %292 = arith.divf %290, %291 : vector<2x128xf32>
    %293 = math.tanh %287 : vector<2x128xf32>
    %294 = vector.extract_strided_slice %292 {offsets = [0, 0], sizes = [2, 32], strides = [1, 1]} : vector<2x128xf32> to vector<2x32xf32>
    %295 = arith.mulf %294, %254 : vector<2x32xf32>
    %296 = vector.extract_strided_slice %292 {offsets = [0, 32], sizes = [2, 32], strides = [1, 1]} : vector<2x128xf32> to vector<2x32xf32>
    %297 = vector.extract_strided_slice %293 {offsets = [0, 64], sizes = [2, 32], strides = [1, 1]} : vector<2x128xf32> to vector<2x32xf32>
    %298 = arith.mulf %296, %297 : vector<2x32xf32>
    %299 = arith.addf %295, %298 : vector<2x32xf32>
    %300 = vector.extract_strided_slice %292 {offsets = [0, 96], sizes = [2, 32], strides = [1, 1]} : vector<2x128xf32> to vector<2x32xf32>
    %301 = math.tanh %299 : vector<2x32xf32>
    %302 = arith.mulf %300, %301 : vector<2x32xf32>
    %cst_89 = arith.constant dense<0.000000e+00> : vector<2x128xf32>
    %303 = tpu.matmul %276, %1, %cst_89 {dimension_numbers = #tpu.dot_dimension_numbers<[1], [0], [0], [1], [0, 0, 1, 1], [], []>} : vector<2x32xf32>, vector<32x128xf32>, vector<2x128xf32> -> vector<2x128xf32>
    %cst_90 = arith.constant dense<0.000000e+00> : vector<2x128xf32>
    %304 = tpu.matmul %302, %2, %cst_90 {dimension_numbers = #tpu.dot_dimension_numbers<[1], [0], [0], [1], [0, 0, 1, 1], [], []>} : vector<2x32xf32>, vector<32x128xf32>, vector<2x128xf32> -> vector<2x128xf32>
    %305 = arith.addf %303, %304 : vector<2x128xf32>
    %306 = arith.addf %305, %5 : vector<2x128xf32>
    %307 = arith.negf %306 : vector<2x128xf32>
    %308 = math.exp %307 : vector<2x128xf32>
    %cst_91 = arith.constant 1.000000e+00 : f32
    %309 = vector.broadcast %cst_91 : f32 to vector<2x128xf32>
    %310 = arith.addf %309, %308 : vector<2x128xf32>
    %311 = arith.divf %309, %310 : vector<2x128xf32>
    %312 = math.tanh %306 : vector<2x128xf32>
    %313 = vector.extract_strided_slice %311 {offsets = [0, 0], sizes = [2, 32], strides = [1, 1]} : vector<2x128xf32> to vector<2x32xf32>
    %314 = arith.mulf %313, %273 : vector<2x32xf32>
    %315 = vector.extract_strided_slice %311 {offsets = [0, 32], sizes = [2, 32], strides = [1, 1]} : vector<2x128xf32> to vector<2x32xf32>
    %316 = vector.extract_strided_slice %312 {offsets = [0, 64], sizes = [2, 32], strides = [1, 1]} : vector<2x128xf32> to vector<2x32xf32>
    %317 = arith.mulf %315, %316 : vector<2x32xf32>
    %318 = arith.addf %314, %317 : vector<2x32xf32>
    %319 = vector.extract_strided_slice %311 {offsets = [0, 96], sizes = [2, 32], strides = [1, 1]} : vector<2x128xf32> to vector<2x32xf32>
    %320 = math.tanh %318 : vector<2x32xf32>
    %321 = arith.mulf %319, %320 : vector<2x32xf32>
    %c0_92 = arith.constant 0 : index
    %c7 = arith.constant 7 : index
    %322 = memref.load %arg0[%c0_92, %c7] : memref<2x8xi32, #tpu.memory_space<smem>>
    %323 = arith.index_cast %322 : i32 to index
    %c0_93 = arith.constant 0 : index
    %c0_94 = arith.constant 0 : index
    %324 = vector.load %arg1[%323, %c0_93, %c0_94] : memref<32x1x128xf32, #tpu.memory_space<vmem>>, vector<1x1x128xf32>
    %325 = vector.shape_cast %324 : vector<1x1x128xf32> to vector<1x128xf32>
    %c1_95 = arith.constant 1 : index
    %c7_96 = arith.constant 7 : index
    %326 = memref.load %arg0[%c1_95, %c7_96] : memref<2x8xi32, #tpu.memory_space<smem>>
    %327 = arith.index_cast %326 : i32 to index
    %c0_97 = arith.constant 0 : index
    %c0_98 = arith.constant 0 : index
    %328 = vector.load %arg1[%327, %c0_97, %c0_98] : memref<32x1x128xf32, #tpu.memory_space<vmem>>, vector<1x1x128xf32>
    %329 = vector.shape_cast %328 : vector<1x1x128xf32> to vector<1x128xf32>
    %330 = tpu.concatenate %325, %329 in 0 : vector<1x128xf32>, vector<1x128xf32> -> vector<2x128xf32>
    %cst_99 = arith.constant dense<0.000000e+00> : vector<2x128xf32>
    %331 = tpu.matmul %302, %0, %cst_99 {dimension_numbers = #tpu.dot_dimension_numbers<[1], [0], [0], [1], [0, 0, 1, 1], [], []>} : vector<2x32xf32>, vector<32x128xf32>, vector<2x128xf32> -> vector<2x128xf32>
    %332 = arith.addf %331, %330 : vector<2x128xf32>
    %333 = arith.negf %332 : vector<2x128xf32>
    %334 = math.exp %333 : vector<2x128xf32>
    %cst_100 = arith.constant 1.000000e+00 : f32
    %335 = vector.broadcast %cst_100 : f32 to vector<2x128xf32>
    %336 = arith.addf %335, %334 : vector<2x128xf32>
    %337 = arith.divf %335, %336 : vector<2x128xf32>
    %338 = math.tanh %332 : vector<2x128xf32>
    %339 = vector.extract_strided_slice %337 {offsets = [0, 0], sizes = [2, 32], strides = [1, 1]} : vector<2x128xf32> to vector<2x32xf32>
    %340 = arith.mulf %339, %299 : vector<2x32xf32>
    %341 = vector.extract_strided_slice %337 {offsets = [0, 32], sizes = [2, 32], strides = [1, 1]} : vector<2x128xf32> to vector<2x32xf32>
    %342 = vector.extract_strided_slice %338 {offsets = [0, 64], sizes = [2, 32], strides = [1, 1]} : vector<2x128xf32> to vector<2x32xf32>
    %343 = arith.mulf %341, %342 : vector<2x32xf32>
    %344 = arith.addf %340, %343 : vector<2x32xf32>
    %345 = vector.extract_strided_slice %337 {offsets = [0, 96], sizes = [2, 32], strides = [1, 1]} : vector<2x128xf32> to vector<2x32xf32>
    %346 = math.tanh %344 : vector<2x32xf32>
    %347 = arith.mulf %345, %346 : vector<2x32xf32>
    %cst_101 = arith.constant dense<0.000000e+00> : vector<2x128xf32>
    %348 = tpu.matmul %321, %1, %cst_101 {dimension_numbers = #tpu.dot_dimension_numbers<[1], [0], [0], [1], [0, 0, 1, 1], [], []>} : vector<2x32xf32>, vector<32x128xf32>, vector<2x128xf32> -> vector<2x128xf32>
    %cst_102 = arith.constant dense<0.000000e+00> : vector<2x128xf32>
    %349 = tpu.matmul %347, %2, %cst_102 {dimension_numbers = #tpu.dot_dimension_numbers<[1], [0], [0], [1], [0, 0, 1, 1], [], []>} : vector<2x32xf32>, vector<32x128xf32>, vector<2x128xf32> -> vector<2x128xf32>
    %350 = arith.addf %348, %349 : vector<2x128xf32>
    %351 = arith.addf %350, %5 : vector<2x128xf32>
    %352 = arith.negf %351 : vector<2x128xf32>
    %353 = math.exp %352 : vector<2x128xf32>
    %cst_103 = arith.constant 1.000000e+00 : f32
    %354 = vector.broadcast %cst_103 : f32 to vector<2x128xf32>
    %355 = arith.addf %354, %353 : vector<2x128xf32>
    %356 = arith.divf %354, %355 : vector<2x128xf32>
    %357 = math.tanh %351 : vector<2x128xf32>
    %358 = vector.extract_strided_slice %356 {offsets = [0, 0], sizes = [2, 32], strides = [1, 1]} : vector<2x128xf32> to vector<2x32xf32>
    %359 = arith.mulf %358, %318 : vector<2x32xf32>
    %360 = vector.extract_strided_slice %356 {offsets = [0, 32], sizes = [2, 32], strides = [1, 1]} : vector<2x128xf32> to vector<2x32xf32>
    %361 = vector.extract_strided_slice %357 {offsets = [0, 64], sizes = [2, 32], strides = [1, 1]} : vector<2x128xf32> to vector<2x32xf32>
    %362 = arith.mulf %360, %361 : vector<2x32xf32>
    %363 = arith.addf %359, %362 : vector<2x32xf32>
    %364 = vector.extract_strided_slice %356 {offsets = [0, 96], sizes = [2, 32], strides = [1, 1]} : vector<2x128xf32> to vector<2x32xf32>
    %365 = math.tanh %363 : vector<2x32xf32>
    %366 = arith.mulf %364, %365 : vector<2x32xf32>
    %c0_104 = arith.constant 0 : index
    %c0_105 = arith.constant 0 : index
    %367 = vector.load %arg6[%c0_104, %c0_105] : memref<32x32xf32, #tpu.memory_space<vmem>>, vector<32x32xf32>
    %cst_106 = arith.constant dense<0.000000e+00> : vector<2x32xf32>
    %368 = tpu.matmul %366, %367, %cst_106 {dimension_numbers = #tpu.dot_dimension_numbers<[1], [0], [0], [1], [0, 0, 1, 1], [], []>} : vector<2x32xf32>, vector<32x32xf32>, vector<2x32xf32> -> vector<2x32xf32>
    %c0_107 = arith.constant 0 : index
    %c0_108 = arith.constant 0 : index
    %369 = vector.load %arg7[%c0_107, %c0_108] : memref<1x32xf32, #tpu.memory_space<vmem>>, vector<1x32xf32>
    %370 = vector.broadcast %369 : vector<1x32xf32> to vector<2x32xf32>
    %371 = arith.addf %368, %370 : vector<2x32xf32>
    %c0_109 = arith.constant 0 : index
    %c0_110 = arith.constant 0 : index
    %372 = vector.load %arg8[%c0_109, %c0_110] : memref<2x32xf32, #tpu.memory_space<vmem>>, vector<2x32xf32>
    tpu.vector_store %arg8[%c0_109, %c0_110], %371 {strides = array<i32>} : memref<2x32xf32, #tpu.memory_space<vmem>>, vector<2x32xf32>,
    %373 = tpu.concatenate %347, %366, %344, %363 in 1 : vector<2x32xf32>, vector<2x32xf32>, vector<2x32xf32>, vector<2x32xf32> -> vector<2x128xf32>
    %c0_111 = arith.constant 0 : index
    %c0_112 = arith.constant 0 : index
    %374 = vector.load %arg9[%c0_111, %c0_112] : memref<2x128xf32, #tpu.memory_space<vmem>>, vector<2x128xf32>
    tpu.vector_store %arg9[%c0_111, %c0_112], %373 {strides = array<i32>} : memref<2x128xf32, #tpu.memory_space<vmem>>, vector<2x128xf32>,
    return
  }
}

</mosaic_0001>

<llo_original>
// kernel: lstm_double_forward.1
$region0: #{lstm_double_forward.1}
  #allocation0 [shape = 'u32[]', space=smem, size = 0x4, offset = 0x4, fixed_abs, tag = 'smem constant byte address 0x4 - core index']
  #allocation1 [shape = 'u32[144,128]{1,0:T(1,128)}', space=vmem, size = 0x12000, scoped, tag = 'internal scratch']
  %s0 = inlined_call_operand.hbm [shape: s32[2,8], index: 0, kind: input, shape index: {}]
  %s1 = inlined_call_operand.hbm [shape: f32[32,1,128], index: 1, kind: input, shape index: {}]
  %s2 = inlined_call_operand.hbm [shape: f32[32,128], index: 2, kind: input, shape index: {}]
  %s3 = inlined_call_operand.hbm [shape: f32[32,128], index: 3, kind: input, shape index: {}]
  %s4 = inlined_call_operand.hbm [shape: f32[32,128], index: 4, kind: input, shape index: {}]
  %s5 = inlined_call_operand.vmem [shape: f32[1,128], index: 5, kind: input, shape index: {}]
  %s6 = inlined_call_operand.hbm [shape: f32[32,32], index: 6, kind: input, shape index: {}]
  %s7 = inlined_call_operand.vmem [shape: f32[1,32], index: 7, kind: input, shape index: {}]
  %s8 = inlined_call_operand.hbm [shape: f32[2,32], index: 8, kind: output, shape index: {0}]
  %s9 = inlined_call_operand.vmem [shape: f32[2,128], index: 9, kind: output, shape index: {1}]
  %10 = xla_tuple %s8, %s9
  %s11 = sld [smem:[#allocation0]]
  $region74: #{lstm_double_forward.1} parent=0
    _
  %s13 = ssub.s32 1, %s11
  %s14 = scalar_select 0, %s13, %s11
  $region1: #{lstm_double_forward.1} parent=0
    #allocation2 [shape = 'u8[1024]{0}', space=smem, size = 0x400, scoped, tag = 'input window, operand 0, single buffered']
    #allocation3 [shape = 's32[1]{0}', space=sflag, size = 0x4, scoped, tag = 'scoped memory for lstm_double_forward.1']
    #allocation4 [shape = 's32[1]{0}', space=sflag, size = 0x4, scoped, tag = 'scoped memory for lstm_double_forward.1']
    #allocation5 [shape = 's32[1]{0}', space=sflag, size = 0x4, scoped, tag = 'scoped memory for lstm_double_forward.1']
    #allocation6 [shape = 'u8[16384]{0}', space=vmem, size = 0x4000, scoped, tag = 'input window, operand 1, single buffered']
    #allocation7 [shape = 'u8[16384]{0}', space=vmem, size = 0x4000, scoped, tag = 'input window, operand 2, single buffered']
    #allocation8 [shape = 's32[1]{0}', space=sflag, size = 0x4, scoped, tag = 'scoped memory for lstm_double_forward.1']
    #allocation9 [shape = 'u8[16384]{0}', space=vmem, size = 0x4000, scoped, tag = 'input window, operand 3, single buffered']
    #allocation10 [shape = 'u8[16384]{0}', space=vmem, size = 0x4000, scoped, tag = 'input window, operand 4, single buffered']
    #allocation11 [shape = 's32[1]{0}', space=sflag, size = 0x4, scoped, tag = 'scoped memory for lstm_double_forward.1']
    #allocation12 [shape = 'u8[16384]{0}', space=vmem, size = 0x4000, scoped, tag = 'input window, operand 6, single buffered']
    #allocation13 [shape = 'u8[1024]{0}', space=vmem, size = 0x400, scoped, tag = 'output window, operand 0, single buffered']
    %15 = vsyncpa [#allocation5], 0
    %16 = vsyncpa [#allocation3], 0
    %17 = vsyncpa [#allocation8], 0
    %18 = vsyncpa [#allocation11], 0
    %19 = vsyncpa [#allocation4], 0
    // Predicated region
    $region2: #{lstm_double_forward.1} parent=1 // pred_check
      _
    $region3: #{lstm_double_forward.1} parent=1 // pred_check_branch
      %21 = sbr.rel (0) target = $region5
    $region4: #{lstm_double_forward.1} parent=1 // pred_region
      %s23 = ssub.s32 32, 32
      %24 = vsyncadd [#allocation5], %s23
      %27 = dma.hbm_to_smem %s0, 32, [#allocation2], [#allocation5]
    $region5: #{lstm_double_forward.1} parent=1 // pred_fallthru
      _
    // Predicated region
    $region6: #{lstm_double_forward.1} parent=1 // pred_check
      _
    $region7: #{lstm_double_forward.1} parent=1 // pred_check_branch
      %29 = sbr.rel (0) target = $region9
    $region8: #{lstm_double_forward.1} parent=1 // pred_region
      %s31 = ssub.s32 512, 512
      %32 = vsyncadd [#allocation3], %s31
      %s33 = sshll.u32 [#allocation6], 4
      %s34 = int_to_ptr.vmem [resolvable:$true] %s33
      %39 = dma.hbm_to_vmem [thread:$0]  %s1, 512, %s34, [#allocation3], 16, 16, 1
    $region9: #{lstm_double_forward.1} parent=1 // pred_fallthru
      _
    // Predicated region
    $region10: #{lstm_double_forward.1} parent=1 // pred_check
      _
    $region11: #{lstm_double_forward.1} parent=1 // pred_check_branch
      %41 = sbr.rel (0) target = $region13
    $region12: #{lstm_double_forward.1} parent=1 // pred_region
      %s43 = ssub.s32 512, 512
      %44 = vsyncadd [#allocation8], %s43
      %s45 = sshll.u32 [#allocation7], 4
      %s46 = int_to_ptr.vmem [resolvable:$true] %s45
      %51 = dma.hbm_to_vmem [thread:$0]  %s2, 512, %s46, [#allocation8], 128, 128, 8
    $region13: #{lstm_double_forward.1} parent=1 // pred_fallthru
      _
    // Predicated region
    $region14: #{lstm_double_forward.1} parent=1 // pred_check
      _
    $region15: #{lstm_double_forward.1} parent=1 // pred_check_branch
      %53 = sbr.rel (0) target = $region17
    $region16: #{lstm_double_forward.1} parent=1 // pred_region
      %s55 = ssub.s32 512, 512
      %56 = vsyncadd [#allocation8], %s55
      %s57 = sshll.u32 [#allocation9], 4
      %s58 = int_to_ptr.vmem [resolvable:$true] %s57
      %63 = dma.hbm_to_vmem [thread:$0]  %s3, 512, %s58, [#allocation8], 128, 128, 8
    $region17: #{lstm_double_forward.1} parent=1 // pred_fallthru
      _
    // Predicated region
    $region18: #{lstm_double_forward.1} parent=1 // pred_check
      _
    $region19: #{lstm_double_forward.1} parent=1 // pred_check_branch
      %65 = sbr.rel (0) target = $region21
    $region20: #{lstm_double_forward.1} parent=1 // pred_region
      %s67 = ssub.s32 512, 512
      %68 = vsyncadd [#allocation11], %s67
      %s69 = sshll.u32 [#allocation10], 4
      %s70 = int_to_ptr.vmem [resolvable:$true] %s69
      %75 = dma.hbm_to_vmem [thread:$0]  %s4, 512, %s70, [#allocation11], 128, 128, 8
    $region21: #{lstm_double_forward.1} parent=1 // pred_fallthru
      _
    // Predicated region
    $region22: #{lstm_double_forward.1} parent=1 // pred_check
      _
    $region23: #{lstm_double_forward.1} parent=1 // pred_check_branch
      %77 = sbr.rel (0) target = $region25
    $region24: #{lstm_double_forward.1} parent=1 // pred_region
      _
    $region25: #{lstm_double_forward.1} parent=1 // pred_fallthru
      _
    // Predicated region
    $region26: #{lstm_double_forward.1} parent=1 // pred_check
      _
    $region27: #{lstm_double_forward.1} parent=1 // pred_check_branch
      %79 = sbr.rel (0) target = $region29
    $region28: #{lstm_double_forward.1} parent=1 // pred_region
      %s81 = ssub.s32 512, 512
      %82 = vsyncadd [#allocation11], %s81
      %s83 = sshll.u32 [#allocation12], 4
      %s84 = int_to_ptr.vmem [resolvable:$true] %s83
      %89 = dma.hbm_to_vmem [thread:$0]  %s6, 512, %s84, [#allocation11], 128, 128, 8
    $region29: #{lstm_double_forward.1} parent=1 // pred_fallthru
      _
    // Predicated region
    $region30: #{lstm_double_forward.1} parent=1 // pred_check
      _
    $region31: #{lstm_double_forward.1} parent=1 // pred_check_branch
      %91 = sbr.rel (0) target = $region33
    $region32: #{lstm_double_forward.1} parent=1 // pred_region
      _
    $region33: #{lstm_double_forward.1} parent=1 // pred_fallthru
      _
    // Predicated region
    $region34: #{lstm_double_forward.1} parent=1 // pred_check
      _
    $region35: #{lstm_double_forward.1} parent=1 // pred_check_branch
      %93 = sbr.rel (0) target = $region37
    $region36: #{lstm_double_forward.1} parent=1 // pred_region
      %94 = dma.done [#allocation5], 32
    $region37: #{lstm_double_forward.1} parent=1 // pred_fallthru
      _
    // Predicated region
    $region38: #{lstm_double_forward.1} parent=1 // pred_check
      _
    $region39: #{lstm_double_forward.1} parent=1 // pred_check_branch
      %96 = sbr.rel (0) target = $region41
    $region40: #{lstm_double_forward.1} parent=1 // pred_region
      %97 = dma.done [#allocation3], 512
    $region41: #{lstm_double_forward.1} parent=1 // pred_fallthru
      _
    // Predicated region
    $region42: #{lstm_double_forward.1} parent=1 // pred_check
      _
    $region43: #{lstm_double_forward.1} parent=1 // pred_check_branch
      %99 = sbr.rel (0) target = $region45
    $region44: #{lstm_double_forward.1} parent=1 // pred_region
      %100 = dma.done [#allocation8], 512
    $region45: #{lstm_double_forward.1} parent=1 // pred_fallthru
      _
    // Predicated region
    $region46: #{lstm_double_forward.1} parent=1 // pred_check
      _
    $region47: #{lstm_double_forward.1} parent=1 // pred_check_branch
      %102 = sbr.rel (0) target = $region49
    $region48: #{lstm_double_forward.1} parent=1 // pred_region
      %103 = dma.done [#allocation8], 512
    $region49: #{lstm_double_forward.1} parent=1 // pred_fallthru
      _
    // Predicated region
    $region50: #{lstm_double_forward.1} parent=1 // pred_check
      _
    $region51: #{lstm_double_forward.1} parent=1 // pred_check_branch
      %105 = sbr.rel (0) target = $region53
    $region52: #{lstm_double_forward.1} parent=1 // pred_region
      %106 = dma.done [#allocation11], 512
    $region53: #{lstm_double_forward.1} parent=1 // pred_fallthru
      _
    // Predicated region
    $region54: #{lstm_double_forward.1} parent=1 // pred_check
      _
    $region55: #{lstm_double_forward.1} parent=1 // pred_check_branch
      %108 = sbr.rel (0) target = $region57
    $region56: #{lstm_double_forward.1} parent=1 // pred_region
      %109 = dma.done [#allocation11], 512
    $region57: #{lstm_double_forward.1} parent=1 // pred_fallthru
      _
    %110 = sfence
    %v111 = vld [vmem:[#allocation7] sm:$0xff]
    %v112 = vld [vmem:[#allocation7 + $0x8] sm:$0xff]
    %v113 = vld [vmem:[#allocation7 + $0x10] sm:$0xff]
    %v114 = vld [vmem:[#allocation7 + $0x18] sm:$0xff]
    %v115 = vld [vmem:[#allocation9] sm:$0xff]
    %v116 = vld [vmem:[#allocation9 + $0x8] sm:$0xff]
    %v117 = vld [vmem:[#allocation9 + $0x10] sm:$0xff]
    %v118 = vld [vmem:[#allocation9 + $0x18] sm:$0xff]
    %v119 = vld [vmem:[#allocation10] sm:$0xff]
    %v120 = vld [vmem:[#allocation10 + $0x8] sm:$0xff]
    %v121 = vld [vmem:[#allocation10 + $0x10] sm:$0xff]
    %v122 = vld [vmem:[#allocation10 + $0x18] sm:$0xff]
    %v123 = vld [vmem:[%s5] sm:$0x1]
    %v125 = vlaneseq
    %v126 = vshrl.u32 %v125, 7
    %v127 = vsub.s32 0, %v126
    %v128 = vrot.slane %v123, %v127
    %s130 = sld [smem:[#allocation2]]
    %s131 = scalar_lea.vmem [#allocation6], %s130
    %v132 = vld [vmem:[%s131] sm:$0x1]
    %s133 = sld [smem:[#allocation2 + $0x80]]
    %s134 = scalar_lea.vmem [#allocation6], %s133
    %v135 = vld [vmem:[%s134] sm:$0x1]
    %v137 = vlaneseq
    %v138 = vshrl.u32 %v137, 7
    %v139 = vsub.s32 0, %v138
    %v140 = vrot.slane %v135, %v139
    %vm142 = vcmask 1040384
    %v143 = vsel %vm142, %v132, %v140
    %vm144 = vcmask 261120
    %v146 = vsel %vm144, 0.0, 0
    %148 = vmatprep.subr.mxu0 0.0
    %149 = vmatpush1.msra.mxu0 0.0
    %150 = vmatprep.subr.mxu0 0.0
    %151 = vmatpush1.msra.mxu0 0.0
    %152 = vmatprep.subr.mxu0 0.0
    %153 = vmatpush1.msra.mxu0 0.0
    %154 = vmatprep.subr.mxu0 0.0
    %155 = vmatpush1.msra.mxu0 0.0
    %156 = vmatprep.subr.mxu0 0.0
    %157 = vmatpush1.msra.mxu0 0.0
    %158 = vmatprep.subr.mxu0 0.0
    %159 = vmatpush1.msra.mxu0 0.0
    %160 = vmatprep.subr.mxu0 0.0
    %161 = vmatpush1.msra.mxu0 0.0
    %162 = vmatprep.subr.mxu0 0.0
    %163 = vmatpush1.msra.mxu0 0.0
    %164 = vmatprep.subr.mxu0 0.0
    %165 = vmatpush1.msra.mxu0 0.0
    %166 = vmatprep.subr.mxu0 0.0
    %167 = vmatpush1.msra.mxu0 0.0
    %168 = vmatprep.subr.mxu0 0.0
    %169 = vmatpush1.msra.mxu0 0.0
    %170 = vmatprep.subr.mxu0 0.0
    %171 = vmatpush1.msra.mxu0 0.0
    %172 = vmatprep.subr.mxu0 0.0
    %173 = vmatpush1.msra.mxu0 %v114
    %174 = vmatprep.subr.mxu0 0.0
    %175 = vmatpush1.msra.mxu0 %v113
    %176 = vmatprep.subr.mxu0 0.0
    %177 = vmatpush1.msra.mxu0 %v112
    %178 = vmatprep.subr.mxu0 0.0
    %179 = vmatpush1.msra.mxu0 %v111
    %180 = vmatprep.subr.mxu0 0.0
    %181 = vmatpush2.msra.mxu0 0.0
    %182 = vmatprep.subr.mxu0 0.0
    %183 = vmatpush2.msra.mxu0 0.0
    %184 = vmatprep.subr.mxu0 0.0
    %185 = vmatpush2.msra.mxu0 0.0
    %186 = vmatprep.subr.mxu0 0.0
    %187 = vmatpush2.msra.mxu0 0.0
    %188 = vmatprep.subr.mxu0 0.0
    %189 = vmatpush2.msra.mxu0 0.0
    %190 = vmatprep.subr.mxu0 0.0
    %191 = vmatpush2.msra.mxu0 0.0
    %192 = vmatprep.subr.mxu0 0.0
    %193 = vmatpush2.msra.mxu0 0.0
    %194 = vmatprep.subr.mxu0 0.0
    %195 = vmatpush2.msra.mxu0 0.0
    %196 = vmatprep.subr.mxu0 0.0
    %197 = vmatpush2.msra.mxu0 0.0
    %198 = vmatprep.subr.mxu0 0.0
    %199 = vmatpush2.msra.mxu0 0.0
    %200 = vmatprep.subr.mxu0 0.0
    %201 = vmatpush2.msra.mxu0 0.0
    %202 = vmatprep.subr.mxu0 0.0
    %203 = vmatpush2.msra.mxu0 0.0
    %204 = vmatprep.subr.mxu0 0.0
    %205 = vmatpush2.msra.mxu0 0.0
    %206 = vmatprep.subr.mxu0 0.0
    %207 = vmatpush2.msra.mxu0 0.0
    %208 = vmatprep.subr.mxu0 0.0
    %209 = vmatpush2.msra.mxu0 0.0
    %210 = vmatprep.subr.mxu0 0.0
    %211 = vmatpush2.msra.mxu0 0.0
    %212 = vmatprep.mubr.f32.mxu0 0.0
    %213 = vmatmul.mubr.f32.gmra.mxu0 %v146
    %v214 = vpop.f32.mrf.mxu0
    %v215 = vadd.f32 %v143, %v214
    %v216 = vpop.f32.mrf.mxu0
    %217 = vdwg.mxu0
    %v218 = vxor.u32 %v215, 2147483648
    %v219 = vmul.f32 %v218, 1.442695
    %v220 = vpow.pop %v219
    %v221 = vadd.f32 %v220, 1.0
    %v222 = vrcp.pop %v221
    %v223 = vmul.f32 1.0, %v222
    %v224 = vtanh.pop %v215
    %v225 = vmul.f32 %v223, 0.0
    %227 = vrot.lane.b32.xlu0 %v224, 96
    %v228 = vpop.permute.xlu0 %227
    %v230 = vmul.f32 %v223, %v228
    %232 = vrot.lane.b32.xlu0 %v230, 96
    %v233 = vpop.permute.xlu0 %232
    %v235 = vadd.f32 %v225, %v233
    %v236 = vtanh.pop %v235
    %238 = vrot.lane.b32.xlu0 %v236, 96
    %v239 = vpop.permute.xlu0 %238
    %v241 = vmul.f32 %v223, %v239
    %243 = vrot.lane.b32.xlu0 %v241, 32
    %v244 = vpop.permute.xlu0 %243
    %v245 = vsel %vm144, %v244, 0
    %247 = vmatprep.subr.mxu0 0.0
    %248 = vmatpush1.msra.mxu0 0.0
    %249 = vmatprep.subr.mxu0 0.0
    %250 = vmatpush1.msra.mxu0 0.0
    %251 = vmatprep.subr.mxu0 0.0
    %252 = vmatpush1.msra.mxu0 0.0
    %253 = vmatprep.subr.mxu0 0.0
    %254 = vmatpush1.msra.mxu0 0.0
    %255 = vmatprep.subr.mxu0 0.0
    %256 = vmatpush1.msra.mxu0 0.0
    %257 = vmatprep.subr.mxu0 0.0
    %258 = vmatpush1.msra.mxu0 0.0
    %259 = vmatprep.subr.mxu0 0.0
    %260 = vmatpush1.msra.mxu0 0.0
    %261 = vmatprep.subr.mxu0 0.0
    %262 = vmatpush1.msra.mxu0 0.0
    %263 = vmatprep.subr.mxu0 0.0
    %264 = vmatpush1.msra.mxu0 0.0
    %265 = vmatprep.subr.mxu0 0.0
    %266 = vmatpush1.msra.mxu0 0.0
    %267 = vmatprep.subr.mxu0 0.0
    %268 = vmatpush1.msra.mxu0 0.0
    %269 = vmatprep.subr.mxu0 0.0
    %270 = vmatpush1.msra.mxu0 0.0
    %271 = vmatprep.subr.mxu0 0.0
    %272 = vmatpush1.msra.mxu0 %v122
    %273 = vmatprep.subr.mxu0 0.0
    %274 = vmatpush1.msra.mxu0 %v121
    %275 = vmatprep.subr.mxu0 0.0
    %276 = vmatpush1.msra.mxu0 %v120
    %277 = vmatprep.subr.mxu0 0.0
    %278 = vmatpush1.msra.mxu0 %v119
    %279 = vmatprep.subr.mxu0 0.0
    %280 = vmatpush2.msra.mxu0 0.0
    %281 = vmatprep.subr.mxu0 0.0
    %282 = vmatpush2.msra.mxu0 0.0
    %283 = vmatprep.subr.mxu0 0.0
    %284 = vmatpush2.msra.mxu0 0.0
    %285 = vmatprep.subr.mxu0 0.0
    %286 = vmatpush2.msra.mxu0 0.0
    %287 = vmatprep.subr.mxu0 0.0
    %288 = vmatpush2.msra.mxu0 0.0
    %289 = vmatprep.subr.mxu0 0.0
    %290 = vmatpush2.msra.mxu0 0.0
    %291 = vmatprep.subr.mxu0 0.0
    %292 = vmatpush2.msra.mxu0 0.0
    %293 = vmatprep.subr.mxu0 0.0
    %294 = vmatpush2.msra.mxu0 0.0
    %295 = vmatprep.subr.mxu0 0.0
    %296 = vmatpush2.msra.mxu0 0.0
    %297 = vmatprep.subr.mxu0 0.0
    %298 = vmatpush2.msra.mxu0 0.0
    %299 = vmatprep.subr.mxu0 0.0
    %300 = vmatpush2.msra.mxu0 0.0
    %301 = vmatprep.subr.mxu0 0.0
    %302 = vmatpush2.msra.mxu0 0.0
    %303 = vmatprep.subr.mxu0 0.0
    %304 = vmatpush2.msra.mxu0 0.0
    %305 = vmatprep.subr.mxu0 0.0
    %306 = vmatpush2.msra.mxu0 0.0
    %307 = vmatprep.subr.mxu0 0.0
    %308 = vmatpush2.msra.mxu0 0.0
    %309 = vmatprep.subr.mxu0 0.0
    %310 = vmatpush2.msra.mxu0 0.0
    %311 = vmatprep.mubr.f32.mxu0 0.0
    %312 = vmatmul.mubr.f32.gmra.mxu0 %v245
    %v313 = vpop.f32.mrf.mxu0
    %v314 = vadd.f32 0.0, %v313
    %v315 = vpop.f32.mrf.mxu0
    %316 = vdwg.mxu0
    %317 = vmatprep.subr.mxu0 0.0
    %318 = vmatpush1.msra.mxu0 0.0
    %319 = vmatprep.subr.mxu0 0.0
    %320 = vmatpush1.msra.mxu0 0.0
    %321 = vmatprep.subr.mxu0 0.0
    %322 = vmatpush1.msra.mxu0 0.0
    %323 = vmatprep.subr.mxu0 0.0
    %324 = vmatpush1.msra.mxu0 0.0
    %325 = vmatprep.subr.mxu0 0.0
    %326 = vmatpush1.msra.mxu0 0.0
    %327 = vmatprep.subr.mxu0 0.0
    %328 = vmatpush1.msra.mxu0 0.0
    %329 = vmatprep.subr.mxu0 0.0
    %330 = vmatpush1.msra.mxu0 0.0
    %331 = vmatprep.subr.mxu0 0.0
    %332 = vmatpush1.msra.mxu0 0.0
    %333 = vmatprep.subr.mxu0 0.0
    %334 = vmatpush1.msra.mxu0 0.0
    %335 = vmatprep.subr.mxu0 0.0
    %336 = vmatpush1.msra.mxu0 0.0
    %337 = vmatprep.subr.mxu0 0.0
    %338 = vmatpush1.msra.mxu0 0.0
    %339 = vmatprep.subr.mxu0 0.0
    %340 = vmatpush1.msra.mxu0 0.0
    %341 = vmatprep.subr.mxu0 0.0
    %342 = vmatpush1.msra.mxu0 %v118
    %343 = vmatprep.subr.mxu0 0.0
    %344 = vmatpush1.msra.mxu0 %v117
    %345 = vmatprep.subr.mxu0 0.0
    %346 = vmatpush1.msra.mxu0 %v116
    %347 = vmatprep.subr.mxu0 0.0
    %348 = vmatpush1.msra.mxu0 %v115
    %349 = vmatprep.subr.mxu0 0.0
    %350 = vmatpush2.msra.mxu0 0.0
    %351 = vmatprep.subr.mxu0 0.0
    %352 = vmatpush2.msra.mxu0 0.0
    %353 = vmatprep.subr.mxu0 0.0
    %354 = vmatpush2.msra.mxu0 0.0
    %355 = vmatprep.subr.mxu0 0.0
    %356 = vmatpush2.msra.mxu0 0.0
    %357 = vmatprep.subr.mxu0 0.0
    %358 = vmatpush2.msra.mxu0 0.0
    %359 = vmatprep.subr.mxu0 0.0
    %360 = vmatpush2.msra.mxu0 0.0
    %361 = vmatprep.subr.mxu0 0.0
    %362 = vmatpush2.msra.mxu0 0.0
    %363 = vmatprep.subr.mxu0 0.0
    %364 = vmatpush2.msra.mxu0 0.0
    %365 = vmatprep.subr.mxu0 0.0
    %366 = vmatpush2.msra.mxu0 0.0
    %367 = vmatprep.subr.mxu0 0.0
    %368 = vmatpush2.msra.mxu0 0.0
    %369 = vmatprep.subr.mxu0 0.0
    %370 = vmatpush2.msra.mxu0 0.0
    %371 = vmatprep.subr.mxu0 0.0
    %372 = vmatpush2.msra.mxu0 0.0
    %373 = vmatprep.subr.mxu0 0.0
    %374 = vmatpush2.msra.mxu0 0.0
    %375 = vmatprep.subr.mxu0 0.0
    %376 = vmatpush2.msra.mxu0 0.0
    %377 = vmatprep.subr.mxu0 0.0
    %378 = vmatpush2.msra.mxu0 0.0
    %379 = vmatprep.subr.mxu0 0.0
    %380 = vmatpush2.msra.mxu0 0.0
    %381 = vmatprep.mubr.f32.mxu0 0.0
    %382 = vmatmul.mubr.f32.gmra.mxu0 %v146
    %v383 = vpop.f32.mrf.mxu0
    %v384 = vadd.f32 %v314, %v383
    %v385 = vpop.f32.mrf.mxu0
    %386 = vdwg.mxu0
    %v387 = vadd.f32 %v384, %v128
    %v388 = vxor.u32 %v387, 2147483648
    %v389 = vmul.f32 %v388, 1.442695
    %v390 = vpow.pop %v389
    %v391 = vadd.f32 %v390, 1.0
    %v392 = vrcp.pop %v391
    %v393 = vmul.f32 1.0, %v392
    %v394 = vtanh.pop %v387
    %v395 = vmul.f32 %v393, 0.0
    %397 = vrot.lane.b32.xlu0 %v394, 96
    %v398 = vpop.permute.xlu0 %397
    %v400 = vmul.f32 %v393, %v398
    %402 = vrot.lane.b32.xlu0 %v400, 96
    %v403 = vpop.permute.xlu0 %402
    %v405 = vadd.f32 %v395, %v403
    %v406 = vtanh.pop %v405
    %408 = vrot.lane.b32.xlu0 %v406, 96
    %v409 = vpop.permute.xlu0 %408
    %v411 = vmul.f32 %v393, %v409
    %s412 = sld [smem:[#allocation2 + $0x1]]
    %s413 = scalar_lea.vmem [#allocation6], %s412
    %v414 = vld [vmem:[%s413] sm:$0x1]
    %s415 = sld [smem:[#allocation2 + $0x81]]
    %s416 = scalar_lea.vmem [#allocation6], %s415
    %v417 = vld [vmem:[%s416] sm:$0x1]
    %v419 = vlaneseq
    %v420 = vshrl.u32 %v419, 7
    %v421 = vsub.s32 0, %v420
    %v422 = vrot.slane %v417, %v421
    %v424 = vsel %vm142, %v414, %v422
    %425 = vmatprep.subr.mxu0 0.0
    %426 = vmatpush1.msra.mxu0 0.0
    %427 = vmatprep.subr.mxu0 0.0
    %428 = vmatpush1.msra.mxu0 0.0
    %429 = vmatprep.subr.mxu0 0.0
    %430 = vmatpush1.msra.mxu0 0.0
    %431 = vmatprep.subr.mxu0 0.0
    %432 = vmatpush1.msra.mxu0 0.0
    %433 = vmatprep.subr.mxu0 0.0
    %434 = vmatpush1.msra.mxu0 0.0
    %435 = vmatprep.subr.mxu0 0.0
    %436 = vmatpush1.msra.mxu0 0.0
    %437 = vmatprep.subr.mxu0 0.0
    %438 = vmatpush1.msra.mxu0 0.0
    %439 = vmatprep.subr.mxu0 0.0
    %440 = vmatpush1.msra.mxu0 0.0
    %441 = vmatprep.subr.mxu0 0.0
    %442 = vmatpush1.msra.mxu0 0.0
    %443 = vmatprep.subr.mxu0 0.0
    %444 = vmatpush1.msra.mxu0 0.0
    %445 = vmatprep.subr.mxu0 0.0
    %446 = vmatpush1.msra.mxu0 0.0
    %447 = vmatprep.subr.mxu0 0.0
    %448 = vmatpush1.msra.mxu0 0.0
    %449 = vmatprep.subr.mxu0 0.0
    %450 = vmatpush1.msra.mxu0 %v114
    %451 = vmatprep.subr.mxu0 0.0
    %452 = vmatpush1.msra.mxu0 %v113
    %453 = vmatprep.subr.mxu0 0.0
    %454 = vmatpush1.msra.mxu0 %v112
    %455 = vmatprep.subr.mxu0 0.0
    %456 = vmatpush1.msra.mxu0 %v111
    %457 = vmatprep.subr.mxu0 0.0
    %458 = vmatpush2.msra.mxu0 0.0
    %459 = vmatprep.subr.mxu0 0.0
    %460 = vmatpush2.msra.mxu0 0.0
    %461 = vmatprep.subr.mxu0 0.0
    %462 = vmatpush2.msra.mxu0 0.0
    %463 = vmatprep.subr.mxu0 0.0
    %464 = vmatpush2.msra.mxu0 0.0
    %465 = vmatprep.subr.mxu0 0.0
    %466 = vmatpush2.msra.mxu0 0.0
    %467 = vmatprep.subr.mxu0 0.0
    %468 = vmatpush2.msra.mxu0 0.0
    %469 = vmatprep.subr.mxu0 0.0
    %470 = vmatpush2.msra.mxu0 0.0
    %471 = vmatprep.subr.mxu0 0.0
    %472 = vmatpush2.msra.mxu0 0.0
    %473 = vmatprep.subr.mxu0 0.0
    %474 = vmatpush2.msra.mxu0 0.0
    %475 = vmatprep.subr.mxu0 0.0
    %476 = vmatpush2.msra.mxu0 0.0
    %477 = vmatprep.subr.mxu0 0.0
    %478 = vmatpush2.msra.mxu0 0.0
    %479 = vmatprep.subr.mxu0 0.0
    %480 = vmatpush2.msra.mxu0 0.0
    %481 = vmatprep.subr.mxu0 0.0
    %482 = vmatpush2.msra.mxu0 0.0
    %483 = vmatprep.subr.mxu0 0.0
    %484 = vmatpush2.msra.mxu0 0.0
    %485 = vmatprep.subr.mxu0 0.0
    %486 = vmatpush2.msra.mxu0 0.0
    %487 = vmatprep.subr.mxu0 0.0
    %488 = vmatpush2.msra.mxu0 0.0
    %489 = vmatprep.mubr.f32.mxu0 0.0
    %490 = vmatmul.mubr.f32.gmra.mxu0 %v245
    %v491 = vpop.f32.mrf.mxu0
    %v492 = vadd.f32 %v424, %v491
    %v493 = vpop.f32.mrf.mxu0
    %494 = vdwg.mxu0
    %v495 = vxor.u32 %v492, 2147483648
    %v496 = vmul.f32 %v495, 1.442695
    %v497 = vpow.pop %v496
    %v498 = vadd.f32 %v497, 1.0
    %v499 = vrcp.pop %v498
    %v500 = vmul.f32 1.0, %v499
    %v501 = vtanh.pop %v492
    %v502 = vmul.f32 %v500, %v235
    %504 = vrot.lane.b32.xlu0 %v501, 96
    %v505 = vpop.permute.xlu0 %504
    %v507 = vmul.f32 %v500, %v505
    %509 = vrot.lane.b32.xlu0 %v507, 96
    %v510 = vpop.permute.xlu0 %509
    %v512 = vadd.f32 %v502, %v510
    %v513 = vtanh.pop %v512
    %515 = vrot.lane.b32.xlu0 %v513, 96
    %v516 = vpop.permute.xlu0 %515
    %v518 = vmul.f32 %v500, %v516
    %520 = vrot.lane.b32.xlu0 %v518, 32
    %v521 = vpop.permute.xlu0 %520
    %v522 = vsel %vm144, %v521, 0
    %524 = vmatprep.subr.mxu0 0.0
    %525 = vmatpush1.msra.mxu0 0.0
    %526 = vmatprep.subr.mxu0 0.0
    %527 = vmatpush1.msra.mxu0 0.0
    %528 = vmatprep.subr.mxu0 0.0
    %529 = vmatpush1.msra.mxu0 0.0
    %530 = vmatprep.subr.mxu0 0.0
    %531 = vmatpush1.msra.mxu0 0.0
    %532 = vmatprep.subr.mxu0 0.0
    %533 = vmatpush1.msra.mxu0 0.0
    %534 = vmatprep.subr.mxu0 0.0
    %535 = vmatpush1.msra.mxu0 0.0
    %536 = vmatprep.subr.mxu0 0.0
    %537 = vmatpush1.msra.mxu0 0.0
    %538 = vmatprep.subr.mxu0 0.0
    %539 = vmatpush1.msra.mxu0 0.0
    %540 = vmatprep.subr.mxu0 0.0
    %541 = vmatpush1.msra.mxu0 0.0
    %542 = vmatprep.subr.mxu0 0.0
    %543 = vmatpush1.msra.mxu0 0.0
    %544 = vmatprep.subr.mxu0 0.0
    %545 = vmatpush1.msra.mxu0 0.0
    %546 = vmatprep.subr.mxu0 0.0
    %547 = vmatpush1.msra.mxu0 0.0
    %548 = vmatprep.subr.mxu0 0.0
    %549 = vmatpush1.msra.mxu0 %v122
    %550 = vmatprep.subr.mxu0 0.0
    %551 = vmatpush1.msra.mxu0 %v121
    %552 = vmatprep.subr.mxu0 0.0
    %553 = vmatpush1.msra.mxu0 %v120
    %554 = vmatprep.subr.mxu0 0.0
    %555 = vmatpush1.msra.mxu0 %v119
    %556 = vmatprep.subr.mxu0 0.0
    %557 = vmatpush2.msra.mxu0 0.0
    %558 = vmatprep.subr.mxu0 0.0
    %559 = vmatpush2.msra.mxu0 0.0
    %560 = vmatprep.subr.mxu0 0.0
    %561 = vmatpush2.msra.mxu0 0.0
    %562 = vmatprep.subr.mxu0 0.0
    %563 = vmatpush2.msra.mxu0 0.0
    %564 = vmatprep.subr.mxu0 0.0
    %565 = vmatpush2.msra.mxu0 0.0
    %566 = vmatprep.subr.mxu0 0.0
    %567 = vmatpush2.msra.mxu0 0.0
    %568 = vmatprep.subr.mxu0 0.0
    %569 = vmatpush2.msra.mxu0 0.0
    %570 = vmatprep.subr.mxu0 0.0
    %571 = vmatpush2.msra.mxu0 0.0
    %572 = vmatprep.subr.mxu0 0.0
    %573 = vmatpush2.msra.mxu0 0.0
    %574 = vmatprep.subr.mxu0 0.0
    %575 = vmatpush2.msra.mxu0 0.0
    %576 = vmatprep.subr.mxu0 0.0
    %577 = vmatpush2.msra.mxu0 0.0
    %578 = vmatprep.subr.mxu0 0.0
    %579 = vmatpush2.msra.mxu0 0.0
    %580 = vmatprep.subr.mxu0 0.0
    %581 = vmatpush2.msra.mxu0 0.0
    %582 = vmatprep.subr.mxu0 0.0
    %583 = vmatpush2.msra.mxu0 0.0
    %584 = vmatprep.subr.mxu0 0.0
    %585 = vmatpush2.msra.mxu0 0.0
    %586 = vmatprep.subr.mxu0 0.0
    %587 = vmatpush2.msra.mxu0 0.0
    %588 = vmatprep.mubr.f32.mxu0 0.0
    %589 = vmatmul.mubr.f32.gmra.mxu0 %v522
    %v590 = vpop.f32.mrf.mxu0
    %v591 = vadd.f32 0.0, %v590
    %v592 = vpop.f32.mrf.mxu0
    %593 = vdwg.mxu0
    %595 = vrot.lane.b32.xlu0 %v411, 32
    %v596 = vpop.permute.xlu0 %595
    %v597 = vsel %vm144, %v596, 0
    %599 = vmatprep.subr.mxu0 0.0
    %600 = vmatpush1.msra.mxu0 0.0
    %601 = vmatprep.subr.mxu0 0.0
    %602 = vmatpush1.msra.mxu0 0.0
    %603 = vmatprep.subr.mxu0 0.0
    %604 = vmatpush1.msra.mxu0 0.0
    %605 = vmatprep.subr.mxu0 0.0
    %606 = vmatpush1.msra.mxu0 0.0
    %607 = vmatprep.subr.mxu0 0.0
    %608 = vmatpush1.msra.mxu0 0.0
    %609 = vmatprep.subr.mxu0 0.0
    %610 = vmatpush1.msra.mxu0 0.0
    %611 = vmatprep.subr.mxu0 0.0
    %612 = vmatpush1.msra.mxu0 0.0
    %613 = vmatprep.subr.mxu0 0.0
    %614 = vmatpush1.msra.mxu0 0.0
    %615 = vmatprep.subr.mxu0 0.0
    %616 = vmatpush1.msra.mxu0 0.0
    %617 = vmatprep.subr.mxu0 0.0
    %618 = vmatpush1.msra.mxu0 0.0
    %619 = vmatprep.subr.mxu0 0.0
    %620 = vmatpush1.msra.mxu0 0.0
    %621 = vmatprep.subr.mxu0 0.0
    %622 = vmatpush1.msra.mxu0 0.0
    %623 = vmatprep.subr.mxu0 0.0
    %624 = vmatpush1.msra.mxu0 %v118
    %625 = vmatprep.subr.mxu0 0.0
    %626 = vmatpush1.msra.mxu0 %v117
    %627 = vmatprep.subr.mxu0 0.0
    %628 = vmatpush1.msra.mxu0 %v116
    %629 = vmatprep.subr.mxu0 0.0
    %630 = vmatpush1.msra.mxu0 %v115
    %631 = vmatprep.subr.mxu0 0.0
    %632 = vmatpush2.msra.mxu0 0.0
    %633 = vmatprep.subr.mxu0 0.0
    %634 = vmatpush2.msra.mxu0 0.0
    %635 = vmatprep.subr.mxu0 0.0
    %636 = vmatpush2.msra.mxu0 0.0
    %637 = vmatprep.subr.mxu0 0.0
    %638 = vmatpush2.msra.mxu0 0.0
    %639 = vmatprep.subr.mxu0 0.0
    %640 = vmatpush2.msra.mxu0 0.0
    %641 = vmatprep.subr.mxu0 0.0
    %642 = vmatpush2.msra.mxu0 0.0
    %643 = vmatprep.subr.mxu0 0.0
    %644 = vmatpush2.msra.mxu0 0.0
    %645 = vmatprep.subr.mxu0 0.0
    %646 = vmatpush2.msra.mxu0 0.0
    %647 = vmatprep.subr.mxu0 0.0
    %648 = vmatpush2.msra.mxu0 0.0
    %649 = vmatprep.subr.mxu0 0.0
    %650 = vmatpush2.msra.mxu0 0.0
    %651 = vmatprep.subr.mxu0 0.0
    %652 = vmatpush2.msra.mxu0 0.0
    %653 = vmatprep.subr.mxu0 0.0
    %654 = vmatpush2.msra.mxu0 0.0
    %655 = vmatprep.subr.mxu0 0.0
    %656 = vmatpush2.msra.mxu0 0.0
    %657 = vmatprep.subr.mxu0 0.0
    %658 = vmatpush2.msra.mxu0 0.0
    %659 = vmatprep.subr.mxu0 0.0
    %660 = vmatpush2.msra.mxu0 0.0
    %661 = vmatprep.subr.mxu0 0.0
    %662 = vmatpush2.msra.mxu0 0.0
    %663 = vmatprep.mubr.f32.mxu0 0.0
    %664 = vmatmul.mubr.f32.gmra.mxu0 %v597
    %v665 = vpop.f32.mrf.mxu0
    %v666 = vadd.f32 %v591, %v665
    %v667 = vpop.f32.mrf.mxu0
    %668 = vdwg.mxu0
    %v669 = vadd.f32 %v666, %v128
    %v670 = vxor.u32 %v669, 2147483648
    %v671 = vmul.f32 %v670, 1.442695
    %v672 = vpow.pop %v671
    %v673 = vadd.f32 %v672, 1.0
    %v674 = vrcp.pop %v673
    %v675 = vmul.f32 1.0, %v674
    %v676 = vtanh.pop %v669
    %v677 = vmul.f32 %v675, %v405
    %679 = vrot.lane.b32.xlu0 %v676, 96
    %v680 = vpop.permute.xlu0 %679
    %v682 = vmul.f32 %v675, %v680
    %684 = vrot.lane.b32.xlu0 %v682, 96
    %v685 = vpop.permute.xlu0 %684
    %v687 = vadd.f32 %v677, %v685
    %v688 = vtanh.pop %v687
    %690 = vrot.lane.b32.xlu0 %v688, 96
    %v691 = vpop.permute.xlu0 %690
    %v693 = vmul.f32 %v675, %v691
    %s694 = sld [smem:[#allocation2 + $0x2]]
    %s695 = scalar_lea.vmem [#allocation6], %s694
    %v696 = vld [vmem:[%s695] sm:$0x1]
    %s697 = sld [smem:[#allocation2 + $0x82]]
    %s698 = scalar_lea.vmem [#allocation6], %s697
    %v699 = vld [vmem:[%s698] sm:$0x1]
    %v701 = vlaneseq
    %v702 = vshrl.u32 %v701, 7
    %v703 = vsub.s32 0, %v702
    %v704 = vrot.slane %v699, %v703
    %v706 = vsel %vm142, %v696, %v704
    %707 = vmatprep.subr.mxu0 0.0
    %708 = vmatpush1.msra.mxu0 0.0
    %709 = vmatprep.subr.mxu0 0.0
    %710 = vmatpush1.msra.mxu0 0.0
    %711 = vmatprep.subr.mxu0 0.0
    %712 = vmatpush1.msra.mxu0 0.0
    %713 = vmatprep.subr.mxu0 0.0
    %714 = vmatpush1.msra.mxu0 0.0
    %715 = vmatprep.subr.mxu0 0.0
    %716 = vmatpush1.msra.mxu0 0.0
    %717 = vmatprep.subr.mxu0 0.0
    %718 = vmatpush1.msra.mxu0 0.0
    %719 = vmatprep.subr.mxu0 0.0
    %720 = vmatpush1.msra.mxu0 0.0
    %721 = vmatprep.subr.mxu0 0.0
    %722 = vmatpush1.msra.mxu0 0.0
    %723 = vmatprep.subr.mxu0 0.0
    %724 = vmatpush1.msra.mxu0 0.0
    %725 = vmatprep.subr.mxu0 0.0
    %726 = vmatpush1.msra.mxu0 0.0
    %727 = vmatprep.subr.mxu0 0.0
    %728 = vmatpush1.msra.mxu0 0.0
    %729 = vmatprep.subr.mxu0 0.0
    %730 = vmatpush1.msra.mxu0 0.0
    %731 = vmatprep.subr.mxu0 0.0
    %732 = vmatpush1.msra.mxu0 %v114
    %733 = vmatprep.subr.mxu0 0.0
    %734 = vmatpush1.msra.mxu0 %v113
    %735 = vmatprep.subr.mxu0 0.0
    %736 = vmatpush1.msra.mxu0 %v112
    %737 = vmatprep.subr.mxu0 0.0
    %738 = vmatpush1.msra.mxu0 %v111
    %739 = vmatprep.subr.mxu0 0.0
    %740 = vmatpush2.msra.mxu0 0.0
    %741 = vmatprep.subr.mxu0 0.0
    %742 = vmatpush2.msra.mxu0 0.0
    %743 = vmatprep.subr.mxu0 0.0
    %744 = vmatpush2.msra.mxu0 0.0
    %745 = vmatprep.subr.mxu0 0.0
    %746 = vmatpush2.msra.mxu0 0.0
    %747 = vmatprep.subr.mxu0 0.0
    %748 = vmatpush2.msra.mxu0 0.0
    %749 = vmatprep.subr.mxu0 0.0
    %750 = vmatpush2.msra.mxu0 0.0
    %751 = vmatprep.subr.mxu0 0.0
    %752 = vmatpush2.msra.mxu0 0.0
    %753 = vmatprep.subr.mxu0 0.0
    %754 = vmatpush2.msra.mxu0 0.0
    %755 = vmatprep.subr.mxu0 0.0
    %756 = vmatpush2.msra.mxu0 0.0
    %757 = vmatprep.subr.mxu0 0.0
    %758 = vmatpush2.msra.mxu0 0.0
    %759 = vmatprep.subr.mxu0 0.0
    %760 = vmatpush2.msra.mxu0 0.0
    %761 = vmatprep.subr.mxu0 0.0
    %762 = vmatpush2.msra.mxu0 0.0
    %763 = vmatprep.subr.mxu0 0.0
    %764 = vmatpush2.msra.mxu0 0.0
    %765 = vmatprep.subr.mxu0 0.0
    %766 = vmatpush2.msra.mxu0 0.0
    %767 = vmatprep.subr.mxu0 0.0
    %768 = vmatpush2.msra.mxu0 0.0
    %769 = vmatprep.subr.mxu0 0.0
    %770 = vmatpush2.msra.mxu0 0.0
    %771 = vmatprep.mubr.f32.mxu0 0.0
    %772 = vmatmul.mubr.f32.gmra.mxu0 %v522
    %v773 = vpop.f32.mrf.mxu0
    %v774 = vadd.f32 %v706, %v773
    %v775 = vpop.f32.mrf.mxu0
    %776 = vdwg.mxu0
    %v777 = vxor.u32 %v774, 2147483648
    %v778 = vmul.f32 %v777, 1.442695
    %v779 = vpow.pop %v778
    %v780 = vadd.f32 %v779, 1.0
    %v781 = vrcp.pop %v780
    %v782 = vmul.f32 1.0, %v781
    %v783 = vtanh.pop %v774
    %v784 = vmul.f32 %v782, %v512
    %786 = vrot.lane.b32.xlu0 %v783, 96
    %v787 = vpop.permute.xlu0 %786
    %v789 = vmul.f32 %v782, %v787
    %791 = vrot.lane.b32.xlu0 %v789, 96
    %v792 = vpop.permute.xlu0 %791
    %v794 = vadd.f32 %v784, %v792
    %v795 = vtanh.pop %v794
    %797 = vrot.lane.b32.xlu0 %v795, 96
    %v798 = vpop.permute.xlu0 %797
    %v800 = vmul.f32 %v782, %v798
    %802 = vrot.lane.b32.xlu0 %v800, 32
    %v803 = vpop.permute.xlu0 %802
    %v804 = vsel %vm144, %v803, 0
    %806 = vmatprep.subr.mxu0 0.0
    %807 = vmatpush1.msra.mxu0 0.0
    %808 = vmatprep.subr.mxu0 0.0
    %809 = vmatpush1.msra.mxu0 0.0
    %810 = vmatprep.subr.mxu0 0.0
    %811 = vmatpush1.msra.mxu0 0.0
    %812 = vmatprep.subr.mxu0 0.0
    %813 = vmatpush1.msra.mxu0 0.0
    %814 = vmatprep.subr.mxu0 0.0
    %815 = vmatpush1.msra.mxu0 0.0
    %816 = vmatprep.subr.mxu0 0.0
    %817 = vmatpush1.msra.mxu0 0.0
    %818 = vmatprep.subr.mxu0 0.0
    %819 = vmatpush1.msra.mxu0 0.0
    %820 = vmatprep.subr.mxu0 0.0
    %821 = vmatpush1.msra.mxu0 0.0
    %822 = vmatprep.subr.mxu0 0.0
    %823 = vmatpush1.msra.mxu0 0.0
    %824 = vmatprep.subr.mxu0 0.0
    %825 = vmatpush1.msra.mxu0 0.0
    %826 = vmatprep.subr.mxu0 0.0
    %827 = vmatpush1.msra.mxu0 0.0
    %828 = vmatprep.subr.mxu0 0.0
    %829 = vmatpush1.msra.mxu0 0.0
    %830 = vmatprep.subr.mxu0 0.0
    %831 = vmatpush1.msra.mxu0 %v122
    %832 = vmatprep.subr.mxu0 0.0
    %833 = vmatpush1.msra.mxu0 %v121
    %834 = vmatprep.subr.mxu0 0.0
    %835 = vmatpush1.msra.mxu0 %v120
    %836 = vmatprep.subr.mxu0 0.0
    %837 = vmatpush1.msra.mxu0 %v119
    %838 = vmatprep.subr.mxu0 0.0
    %839 = vmatpush2.msra.mxu0 0.0
    %840 = vmatprep.subr.mxu0 0.0
    %841 = vmatpush2.msra.mxu0 0.0
    %842 = vmatprep.subr.mxu0 0.0
    %843 = vmatpush2.msra.mxu0 0.0
    %844 = vmatprep.subr.mxu0 0.0
    %845 = vmatpush2.msra.mxu0 0.0
    %846 = vmatprep.subr.mxu0 0.0
    %847 = vmatpush2.msra.mxu0 0.0
    %848 = vmatprep.subr.mxu0 0.0
    %849 = vmatpush2.msra.mxu0 0.0
    %850 = vmatprep.subr.mxu0 0.0
    %851 = vmatpush2.msra.mxu0 0.0
    %852 = vmatprep.subr.mxu0 0.0
    %853 = vmatpush2.msra.mxu0 0.0
    %854 = vmatprep.subr.mxu0 0.0
    %855 = vmatpush2.msra.mxu0 0.0
    %856 = vmatprep.subr.mxu0 0.0
    %857 = vmatpush2.msra.mxu0 0.0
    %858 = vmatprep.subr.mxu0 0.0
    %859 = vmatpush2.msra.mxu0 0.0
    %860 = vmatprep.subr.mxu0 0.0
    %861 = vmatpush2.msra.mxu0 0.0
    %862 = vmatprep.subr.mxu0 0.0
    %863 = vmatpush2.msra.mxu0 0.0
    %864 = vmatprep.subr.mxu0 0.0
    %865 = vmatpush2.msra.mxu0 0.0
    %866 = vmatprep.subr.mxu0 0.0
    %867 = vmatpush2.msra.mxu0 0.0
    %868 = vmatprep.subr.mxu0 0.0
    %869 = vmatpush2.msra.mxu0 0.0
    %870 = vmatprep.mubr.f32.mxu0 0.0
    %871 = vmatmul.mubr.f32.gmra.mxu0 %v804
    %v872 = vpop.f32.mrf.mxu0
    %v873 = vadd.f32 0.0, %v872
    %v874 = vpop.f32.mrf.mxu0
    %875 = vdwg.mxu0
    %877 = vrot.lane.b32.xlu0 %v693, 32
    %v878 = vpop.permute.xlu0 %877
    %v879 = vsel %vm144, %v878, 0
    %881 = vmatprep.subr.mxu0 0.0
    %882 = vmatpush1.msra.mxu0 0.0
    %883 = vmatprep.subr.mxu0 0.0
    %884 = vmatpush1.msra.mxu0 0.0
    %885 = vmatprep.subr.mxu0 0.0
    %886 = vmatpush1.msra.mxu0 0.0
    %887 = vmatprep.subr.mxu0 0.0
    %888 = vmatpush1.msra.mxu0 0.0
    %889 = vmatprep.subr.mxu0 0.0
    %890 = vmatpush1.msra.mxu0 0.0
    %891 = vmatprep.subr.mxu0 0.0
    %892 = vmatpush1.msra.mxu0 0.0
    %893 = vmatprep.subr.mxu0 0.0
    %894 = vmatpush1.msra.mxu0 0.0
    %895 = vmatprep.subr.mxu0 0.0
    %896 = vmatpush1.msra.mxu0 0.0
    %897 = vmatprep.subr.mxu0 0.0
    %898 = vmatpush1.msra.mxu0 0.0
    %899 = vmatprep.subr.mxu0 0.0
    %900 = vmatpush1.msra.mxu0 0.0
    %901 = vmatprep.subr.mxu0 0.0
    %902 = vmatpush1.msra.mxu0 0.0
    %903 = vmatprep.subr.mxu0 0.0
    %904 = vmatpush1.msra.mxu0 0.0
    %905 = vmatprep.subr.mxu0 0.0
    %906 = vmatpush1.msra.mxu0 %v118
    %907 = vmatprep.subr.mxu0 0.0
    %908 = vmatpush1.msra.mxu0 %v117
    %909 = vmatprep.subr.mxu0 0.0
    %910 = vmatpush1.msra.mxu0 %v116
    %911 = vmatprep.subr.mxu0 0.0
    %912 = vmatpush1.msra.mxu0 %v115
    %913 = vmatprep.subr.mxu0 0.0
    %914 = vmatpush2.msra.mxu0 0.0
    %915 = vmatprep.subr.mxu0 0.0
    %916 = vmatpush2.msra.mxu0 0.0
    %917 = vmatprep.subr.mxu0 0.0
    %918 = vmatpush2.msra.mxu0 0.0
    %919 = vmatprep.subr.mxu0 0.0
    %920 = vmatpush2.msra.mxu0 0.0
    %921 = vmatprep.subr.mxu0 0.0
    %922 = vmatpush2.msra.mxu0 0.0
    %923 = vmatprep.subr.mxu0 0.0
    %924 = vmatpush2.msra.mxu0 0.0
    %925 = vmatprep.subr.mxu0 0.0
    %926 = vmatpush2.msra.mxu0 0.0
    %927 = vmatprep.subr.mxu0 0.0
    %928 = vmatpush2.msra.mxu0 0.0
    %929 = vmatprep.subr.mxu0 0.0
    %930 = vmatpush2.msra.mxu0 0.0
    %931 = vmatprep.subr.mxu0 0.0
    %932 = vmatpush2.msra.mxu0 0.0
    %933 = vmatprep.subr.mxu0 0.0
    %934 = vmatpush2.msra.mxu0 0.0
    %935 = vmatprep.subr.mxu0 0.0
    %936 = vmatpush2.msra.mxu0 0.0
    %937 = vmatprep.subr.mxu0 0.0
    %938 = vmatpush2.msra.mxu0 0.0
    %939 = vmatprep.subr.mxu0 0.0
    %940 = vmatpush2.msra.mxu0 0.0
    %941 = vmatprep.subr.mxu0 0.0
    %942 = vmatpush2.msra.mxu0 0.0
    %943 = vmatprep.subr.mxu0 0.0
    %944 = vmatpush2.msra.mxu0 0.0
    %945 = vmatprep.mubr.f32.mxu0 0.0
    %946 = vmatmul.mubr.f32.gmra.mxu0 %v879
    %v947 = vpop.f32.mrf.mxu0
    %v948 = vadd.f32 %v873, %v947
    %v949 = vpop.f32.mrf.mxu0
    %950 = vdwg.mxu0
    %v951 = vadd.f32 %v948, %v128
    %v952 = vxor.u32 %v951, 2147483648
    %v953 = vmul.f32 %v952, 1.442695
    %v954 = vpow.pop %v953
    %v955 = vadd.f32 %v954, 1.0
    %v956 = vrcp.pop %v955
    %v957 = vmul.f32 1.0, %v956
    %v958 = vtanh.pop %v951
    %v959 = vmul.f32 %v957, %v687
    %961 = vrot.lane.b32.xlu0 %v958, 96
    %v962 = vpop.permute.xlu0 %961
    %v964 = vmul.f32 %v957, %v962
    %966 = vrot.lane.b32.xlu0 %v964, 96
    %v967 = vpop.permute.xlu0 %966
    %v969 = vadd.f32 %v959, %v967
    %v970 = vtanh.pop %v969
    %972 = vrot.lane.b32.xlu0 %v970, 96
    %v973 = vpop.permute.xlu0 %972
    %v975 = vmul.f32 %v957, %v973
    %s976 = sld [smem:[#allocation2 + $0x3]]
    %s977 = scalar_lea.vmem [#allocation6], %s976
    %v978 = vld [vmem:[%s977] sm:$0x1]
    %s979 = sld [smem:[#allocation2 + $0x83]]
    %s980 = scalar_lea.vmem [#allocation6], %s979
    %v981 = vld [vmem:[%s980] sm:$0x1]
    %v983 = vlaneseq
    %v984 = vshrl.u32 %v983, 7
    %v985 = vsub.s32 0, %v984
    %v986 = vrot.slane %v981, %v985
    %v988 = vsel %vm142, %v978, %v986
    %989 = vmatprep.subr.mxu0 0.0
    %990 = vmatpush1.msra.mxu0 0.0
    %991 = vmatprep.subr.mxu0 0.0
    %992 = vmatpush1.msra.mxu0 0.0
    %993 = vmatprep.subr.mxu0 0.0
    %994 = vmatpush1.msra.mxu0 0.0
    %995 = vmatprep.subr.mxu0 0.0
    %996 = vmatpush1.msra.mxu0 0.0
    %997 = vmatprep.subr.mxu0 0.0
    %998 = vmatpush1.msra.mxu0 0.0
    %999 = vmatprep.subr.mxu0 0.0
    %1000 = vmatpush1.msra.mxu0 0.0
    %1001 = vmatprep.subr.mxu0 0.0
    %1002 = vmatpush1.msra.mxu0 0.0
    %1003 = vmatprep.subr.mxu0 0.0
    %1004 = vmatpush1.msra.mxu0 0.0
    %1005 = vmatprep.subr.mxu0 0.0
    %1006 = vmatpush1.msra.mxu0 0.0
    %1007 = vmatprep.subr.mxu0 0.0
    %1008 = vmatpush1.msra.mxu0 0.0
    %1009 = vmatprep.subr.mxu0 0.0
    %1010 = vmatpush1.msra.mxu0 0.0
    %1011 = vmatprep.subr.mxu0 0.0
    %1012 = vmatpush1.msra.mxu0 0.0
    %1013 = vmatprep.subr.mxu0 0.0
    %1014 = vmatpush1.msra.mxu0 %v114
    %1015 = vmatprep.subr.mxu0 0.0
    %1016 = vmatpush1.msra.mxu0 %v113
    %1017 = vmatprep.subr.mxu0 0.0
    %1018 = vmatpush1.msra.mxu0 %v112
    %1019 = vmatprep.subr.mxu0 0.0
    %1020 = vmatpush1.msra.mxu0 %v111
    %1021 = vmatprep.subr.mxu0 0.0
    %1022 = vmatpush2.msra.mxu0 0.0
    %1023 = vmatprep.subr.mxu0 0.0
    %1024 = vmatpush2.msra.mxu0 0.0
    %1025 = vmatprep.subr.mxu0 0.0
    %1026 = vmatpush2.msra.mxu0 0.0
    %1027 = vmatprep.subr.mxu0 0.0
    %1028 = vmatpush2.msra.mxu0 0.0
    %1029 = vmatprep.subr.mxu0 0.0
    %1030 = vmatpush2.msra.mxu0 0.0
    %1031 = vmatprep.subr.mxu0 0.0
    %1032 = vmatpush2.msra.mxu0 0.0
    %1033 = vmatprep.subr.mxu0 0.0
    %1034 = vmatpush2.msra.mxu0 0.0
    %1035 = vmatprep.subr.mxu0 0.0
    %1036 = vmatpush2.msra.mxu0 0.0
    %1037 = vmatprep.subr.mxu0 0.0
    %1038 = vmatpush2.msra.mxu0 0.0
    %1039 = vmatprep.subr.mxu0 0.0
    %1040 = vmatpush2.msra.mxu0 0.0
    %1041 = vmatprep.subr.mxu0 0.0
    %1042 = vmatpush2.msra.mxu0 0.0
    %1043 = vmatprep.subr.mxu0 0.0
    %1044 = vmatpush2.msra.mxu0 0.0
    %1045 = vmatprep.subr.mxu0 0.0
    %1046 = vmatpush2.msra.mxu0 0.0
    %1047 = vmatprep.subr.mxu0 0.0
    %1048 = vmatpush2.msra.mxu0 0.0
    %1049 = vmatprep.subr.mxu0 0.0
    %1050 = vmatpush2.msra.mxu0 0.0
    %1051 = vmatprep.subr.mxu0 0.0
    %1052 = vmatpush2.msra.mxu0 0.0
    %1053 = vmatprep.mubr.f32.mxu0 0.0
    %1054 = vmatmul.mubr.f32.gmra.mxu0 %v804
    %v1055 = vpop.f32.mrf.mxu0
    %v1056 = vadd.f32 %v988, %v1055
    %v1057 = vpop.f32.mrf.mxu0
    %1058 = vdwg.mxu0
    %v1059 = vxor.u32 %v1056, 2147483648
    %v1060 = vmul.f32 %v1059, 1.442695
    %v1061 = vpow.pop %v1060
    %v1062 = vadd.f32 %v1061, 1.0
    %v1063 = vrcp.pop %v1062
    %v1064 = vmul.f32 1.0, %v1063
    %v1065 = vtanh.pop %v1056
    %v1066 = vmul.f32 %v1064, %v794
    %1068 = vrot.lane.b32.xlu0 %v1065, 96
    %v1069 = vpop.permute.xlu0 %1068
    %v1071 = vmul.f32 %v1064, %v1069
    %1073 = vrot.lane.b32.xlu0 %v1071, 96
    %v1074 = vpop.permute.xlu0 %1073
    %v1076 = vadd.f32 %v1066, %v1074
    %v1077 = vtanh.pop %v1076
    %1079 = vrot.lane.b32.xlu0 %v1077, 96
    %v1080 = vpop.permute.xlu0 %1079
    %v1082 = vmul.f32 %v1064, %v1080
    %1084 = vrot.lane.b32.xlu0 %v1082, 32
    %v1085 = vpop.permute.xlu0 %1084
    %v1086 = vsel %vm144, %v1085, 0
    %1088 = vmatprep.subr.mxu0 0.0
    %1089 = vmatpush1.msra.mxu0 0.0
    %1090 = vmatprep.subr.mxu0 0.0
    %1091 = vmatpush1.msra.mxu0 0.0
    %1092 = vmatprep.subr.mxu0 0.0
    %1093 = vmatpush1.msra.mxu0 0.0
    %1094 = vmatprep.subr.mxu0 0.0
    %1095 = vmatpush1.msra.mxu0 0.0
    %1096 = vmatprep.subr.mxu0 0.0
    %1097 = vmatpush1.msra.mxu0 0.0
    %1098 = vmatprep.subr.mxu0 0.0
    %1099 = vmatpush1.msra.mxu0 0.0
    %1100 = vmatprep.subr.mxu0 0.0
    %1101 = vmatpush1.msra.mxu0 0.0
    %1102 = vmatprep.subr.mxu0 0.0
    %1103 = vmatpush1.msra.mxu0 0.0
    %1104 = vmatprep.subr.mxu0 0.0
    %1105 = vmatpush1.msra.mxu0 0.0
    %1106 = vmatprep.subr.mxu0 0.0
    %1107 = vmatpush1.msra.mxu0 0.0
    %1108 = vmatprep.subr.mxu0 0.0
    %1109 = vmatpush1.msra.mxu0 0.0
    %1110 = vmatprep.subr.mxu0 0.0
    %1111 = vmatpush1.msra.mxu0 0.0
    %1112 = vmatprep.subr.mxu0 0.0
    %1113 = vmatpush1.msra.mxu0 %v122
    %1114 = vmatprep.subr.mxu0 0.0
    %1115 = vmatpush1.msra.mxu0 %v121
    %1116 = vmatprep.subr.mxu0 0.0
    %1117 = vmatpush1.msra.mxu0 %v120
    %1118 = vmatprep.subr.mxu0 0.0
    %1119 = vmatpush1.msra.mxu0 %v119
    %1120 = vmatprep.subr.mxu0 0.0
    %1121 = vmatpush2.msra.mxu0 0.0
    %1122 = vmatprep.subr.mxu0 0.0
    %1123 = vmatpush2.msra.mxu0 0.0
    %1124 = vmatprep.subr.mxu0 0.0
    %1125 = vmatpush2.msra.mxu0 0.0
    %1126 = vmatprep.subr.mxu0 0.0
    %1127 = vmatpush2.msra.mxu0 0.0
    %1128 = vmatprep.subr.mxu0 0.0
    %1129 = vmatpush2.msra.mxu0 0.0
    %1130 = vmatprep.subr.mxu0 0.0
    %1131 = vmatpush2.msra.mxu0 0.0
    %1132 = vmatprep.subr.mxu0 0.0
    %1133 = vmatpush2.msra.mxu0 0.0
    %1134 = vmatprep.subr.mxu0 0.0
    %1135 = vmatpush2.msra.mxu0 0.0
    %1136 = vmatprep.subr.mxu0 0.0
    %1137 = vmatpush2.msra.mxu0 0.0
    %1138 = vmatprep.subr.mxu0 0.0
    %1139 = vmatpush2.msra.mxu0 0.0
    %1140 = vmatprep.subr.mxu0 0.0
    %1141 = vmatpush2.msra.mxu0 0.0
    %1142 = vmatprep.subr.mxu0 0.0
    %1143 = vmatpush2.msra.mxu0 0.0
    %1144 = vmatprep.subr.mxu0 0.0
    %1145 = vmatpush2.msra.mxu0 0.0
    %1146 = vmatprep.subr.mxu0 0.0
    %1147 = vmatpush2.msra.mxu0 0.0
    %1148 = vmatprep.subr.mxu0 0.0
    %1149 = vmatpush2.msra.mxu0 0.0
    %1150 = vmatprep.subr.mxu0 0.0
    %1151 = vmatpush2.msra.mxu0 0.0
    %1152 = vmatprep.mubr.f32.mxu0 0.0
    %1153 = vmatmul.mubr.f32.gmra.mxu0 %v1086
    %v1154 = vpop.f32.mrf.mxu0
    %v1155 = vadd.f32 0.0, %v1154
    %v1156 = vpop.f32.mrf.mxu0
    %1157 = vdwg.mxu0
    %1159 = vrot.lane.b32.xlu0 %v975, 32
    %v1160 = vpop.permute.xlu0 %1159
    %v1161 = vsel %vm144, %v1160, 0
    %1163 = vmatprep.subr.mxu0 0.0
    %1164 = vmatpush1.msra.mxu0 0.0
    %1165 = vmatprep.subr.mxu0 0.0
    %1166 = vmatpush1.msra.mxu0 0.0
    %1167 = vmatprep.subr.mxu0 0.0
    %1168 = vmatpush1.msra.mxu0 0.0
    %1169 = vmatprep.subr.mxu0 0.0
    %1170 = vmatpush1.msra.mxu0 0.0
    %1171 = vmatprep.subr.mxu0 0.0
    %1172 = vmatpush1.msra.mxu0 0.0
    %1173 = vmatprep.subr.mxu0 0.0
    %1174 = vmatpush1.msra.mxu0 0.0
    %1175 = vmatprep.subr.mxu0 0.0
    %1176 = vmatpush1.msra.mxu0 0.0
    %1177 = vmatprep.subr.mxu0 0.0
    %1178 = vmatpush1.msra.mxu0 0.0
    %1179 = vmatprep.subr.mxu0 0.0
    %1180 = vmatpush1.msra.mxu0 0.0
    %1181 = vmatprep.subr.mxu0 0.0
    %1182 = vmatpush1.msra.mxu0 0.0
    %1183 = vmatprep.subr.mxu0 0.0
    %1184 = vmatpush1.msra.mxu0 0.0
    %1185 = vmatprep.subr.mxu0 0.0
    %1186 = vmatpush1.msra.mxu0 0.0
    %1187 = vmatprep.subr.mxu0 0.0
    %1188 = vmatpush1.msra.mxu0 %v118
    %1189 = vmatprep.subr.mxu0 0.0
    %1190 = vmatpush1.msra.mxu0 %v117
    %1191 = vmatprep.subr.mxu0 0.0
    %1192 = vmatpush1.msra.mxu0 %v116
    %1193 = vmatprep.subr.mxu0 0.0
    %1194 = vmatpush1.msra.mxu0 %v115
    %1195 = vmatprep.subr.mxu0 0.0
    %1196 = vmatpush2.msra.mxu0 0.0
    %1197 = vmatprep.subr.mxu0 0.0
    %1198 = vmatpush2.msra.mxu0 0.0
    %1199 = vmatprep.subr.mxu0 0.0
    %1200 = vmatpush2.msra.mxu0 0.0
    %1201 = vmatprep.subr.mxu0 0.0
    %1202 = vmatpush2.msra.mxu0 0.0
    %1203 = vmatprep.subr.mxu0 0.0
    %1204 = vmatpush2.msra.mxu0 0.0
    %1205 = vmatprep.subr.mxu0 0.0
    %1206 = vmatpush2.msra.mxu0 0.0
    %1207 = vmatprep.subr.mxu0 0.0
    %1208 = vmatpush2.msra.mxu0 0.0
    %1209 = vmatprep.subr.mxu0 0.0
    %1210 = vmatpush2.msra.mxu0 0.0
    %1211 = vmatprep.subr.mxu0 0.0
    %1212 = vmatpush2.msra.mxu0 0.0
    %1213 = vmatprep.subr.mxu0 0.0
    %1214 = vmatpush2.msra.mxu0 0.0
    %1215 = vmatprep.subr.mxu0 0.0
    %1216 = vmatpush2.msra.mxu0 0.0
    %1217 = vmatprep.subr.mxu0 0.0
    %1218 = vmatpush2.msra.mxu0 0.0
    %1219 = vmatprep.subr.mxu0 0.0
    %1220 = vmatpush2.msra.mxu0 0.0
    %1221 = vmatprep.subr.mxu0 0.0
    %1222 = vmatpush2.msra.mxu0 0.0
    %1223 = vmatprep.subr.mxu0 0.0
    %1224 = vmatpush2.msra.mxu0 0.0
    %1225 = vmatprep.subr.mxu0 0.0
    %1226 = vmatpush2.msra.mxu0 0.0
    %1227 = vmatprep.mubr.f32.mxu0 0.0
    %1228 = vmatmul.mubr.f32.gmra.mxu0 %v1161
    %v1229 = vpop.f32.mrf.mxu0
    %v1230 = vadd.f32 %v1155, %v1229
    %v1231 = vpop.f32.mrf.mxu0
    %1232 = vdwg.mxu0
    %v1233 = vadd.f32 %v1230, %v128
    %v1234 = vxor.u32 %v1233, 2147483648
    %v1235 = vmul.f32 %v1234, 1.442695
    %v1236 = vpow.pop %v1235
    %v1237 = vadd.f32 %v1236, 1.0
    %v1238 = vrcp.pop %v1237
    %v1239 = vmul.f32 1.0, %v1238
    %v1240 = vtanh.pop %v1233
    %v1241 = vmul.f32 %v1239, %v969
    %1243 = vrot.lane.b32.xlu0 %v1240, 96
    %v1244 = vpop.permute.xlu0 %1243
    %v1246 = vmul.f32 %v1239, %v1244
    %1248 = vrot.lane.b32.xlu0 %v1246, 96
    %v1249 = vpop.permute.xlu0 %1248
    %v1251 = vadd.f32 %v1241, %v1249
    %v1252 = vtanh.pop %v1251
    %1254 = vrot.lane.b32.xlu0 %v1252, 96
    %v1255 = vpop.permute.xlu0 %1254
    %v1257 = vmul.f32 %v1239, %v1255
    %s1258 = sld [smem:[#allocation2 + $0x4]]
    %s1259 = scalar_lea.vmem [#allocation6], %s1258
    %v1260 = vld [vmem:[%s1259] sm:$0x1]
    %s1261 = sld [smem:[#allocation2 + $0x84]]
    %s1262 = scalar_lea.vmem [#allocation6], %s1261
    %v1263 = vld [vmem:[%s1262] sm:$0x1]
    %v1265 = vlaneseq
    %v1266 = vshrl.u32 %v1265, 7
    %v1267 = vsub.s32 0, %v1266
    %v1268 = vrot.slane %v1263, %v1267
    %v1270 = vsel %vm142, %v1260, %v1268
    %1271 = vmatprep.subr.mxu0 0.0
    %1272 = vmatpush1.msra.mxu0 0.0
    %1273 = vmatprep.subr.mxu0 0.0
    %1274 = vmatpush1.msra.mxu0 0.0
    %1275 = vmatprep.subr.mxu0 0.0
    %1276 = vmatpush1.msra.mxu0 0.0
    %1277 = vmatprep.subr.mxu0 0.0
    %1278 = vmatpush1.msra.mxu0 0.0
    %1279 = vmatprep.subr.mxu0 0.0
    %1280 = vmatpush1.msra.mxu0 0.0
    %1281 = vmatprep.subr.mxu0 0.0
    %1282 = vmatpush1.msra.mxu0 0.0
    %1283 = vmatprep.subr.mxu0 0.0
    %1284 = vmatpush1.msra.mxu0 0.0
    %1285 = vmatprep.subr.mxu0 0.0
    %1286 = vmatpush1.msra.mxu0 0.0
    %1287 = vmatprep.subr.mxu0 0.0
    %1288 = vmatpush1.msra.mxu0 0.0
    %1289 = vmatprep.subr.mxu0 0.0
    %1290 = vmatpush1.msra.mxu0 0.0
    %1291 = vmatprep.subr.mxu0 0.0
    %1292 = vmatpush1.msra.mxu0 0.0
    %1293 = vmatprep.subr.mxu0 0.0
    %1294 = vmatpush1.msra.mxu0 0.0
    %1295 = vmatprep.subr.mxu0 0.0
    %1296 = vmatpush1.msra.mxu0 %v114
    %1297 = vmatprep.subr.mxu0 0.0
    %1298 = vmatpush1.msra.mxu0 %v113
    %1299 = vmatprep.subr.mxu0 0.0
    %1300 = vmatpush1.msra.mxu0 %v112
    %1301 = vmatprep.subr.mxu0 0.0
    %1302 = vmatpush1.msra.mxu0 %v111
    %1303 = vmatprep.subr.mxu0 0.0
    %1304 = vmatpush2.msra.mxu0 0.0
    %1305 = vmatprep.subr.mxu0 0.0
    %1306 = vmatpush2.msra.mxu0 0.0
    %1307 = vmatprep.subr.mxu0 0.0
    %1308 = vmatpush2.msra.mxu0 0.0
    %1309 = vmatprep.subr.mxu0 0.0
    %1310 = vmatpush2.msra.mxu0 0.0
    %1311 = vmatprep.subr.mxu0 0.0
    %1312 = vmatpush2.msra.mxu0 0.0
    %1313 = vmatprep.subr.mxu0 0.0
    %1314 = vmatpush2.msra.mxu0 0.0
    %1315 = vmatprep.subr.mxu0 0.0
    %1316 = vmatpush2.msra.mxu0 0.0
    %1317 = vmatprep.subr.mxu0 0.0
    %1318 = vmatpush2.msra.mxu0 0.0
    %1319 = vmatprep.subr.mxu0 0.0
    %1320 = vmatpush2.msra.mxu0 0.0
    %1321 = vmatprep.subr.mxu0 0.0
    %1322 = vmatpush2.msra.mxu0 0.0
    %1323 = vmatprep.subr.mxu0 0.0
    %1324 = vmatpush2.msra.mxu0 0.0
    %1325 = vmatprep.subr.mxu0 0.0
    %1326 = vmatpush2.msra.mxu0 0.0
    %1327 = vmatprep.subr.mxu0 0.0
    %1328 = vmatpush2.msra.mxu0 0.0
    %1329 = vmatprep.subr.mxu0 0.0
    %1330 = vmatpush2.msra.mxu0 0.0
    %1331 = vmatprep.subr.mxu0 0.0
    %1332 = vmatpush2.msra.mxu0 0.0
    %1333 = vmatprep.subr.mxu0 0.0
    %1334 = vmatpush2.msra.mxu0 0.0
    %1335 = vmatprep.mubr.f32.mxu0 0.0
    %1336 = vmatmul.mubr.f32.gmra.mxu0 %v1086
    %v1337 = vpop.f32.mrf.mxu0
    %v1338 = vadd.f32 %v1270, %v1337
    %v1339 = vpop.f32.mrf.mxu0
    %1340 = vdwg.mxu0
    %v1341 = vxor.u32 %v1338, 2147483648
    %v1342 = vmul.f32 %v1341, 1.442695
    %v1343 = vpow.pop %v1342
    %v1344 = vadd.f32 %v1343, 1.0
    %v1345 = vrcp.pop %v1344
    %v1346 = vmul.f32 1.0, %v1345
    %v1347 = vtanh.pop %v1338
    %v1348 = vmul.f32 %v1346, %v1076
    %1350 = vrot.lane.b32.xlu0 %v1347, 96
    %v1351 = vpop.permute.xlu0 %1350
    %v1353 = vmul.f32 %v1346, %v1351
    %1355 = vrot.lane.b32.xlu0 %v1353, 96
    %v1356 = vpop.permute.xlu0 %1355
    %v1358 = vadd.f32 %v1348, %v1356
    %v1359 = vtanh.pop %v1358
    %1361 = vrot.lane.b32.xlu0 %v1359, 96
    %v1362 = vpop.permute.xlu0 %1361
    %v1364 = vmul.f32 %v1346, %v1362
    %1366 = vrot.lane.b32.xlu0 %v1364, 32
    %v1367 = vpop.permute.xlu0 %1366
    %v1368 = vsel %vm144, %v1367, 0
    %1370 = vmatprep.subr.mxu0 0.0
    %1371 = vmatpush1.msra.mxu0 0.0
    %1372 = vmatprep.subr.mxu0 0.0
    %1373 = vmatpush1.msra.mxu0 0.0
    %1374 = vmatprep.subr.mxu0 0.0
    %1375 = vmatpush1.msra.mxu0 0.0
    %1376 = vmatprep.subr.mxu0 0.0
    %1377 = vmatpush1.msra.mxu0 0.0
    %1378 = vmatprep.subr.mxu0 0.0
    %1379 = vmatpush1.msra.mxu0 0.0
    %1380 = vmatprep.subr.mxu0 0.0
    %1381 = vmatpush1.msra.mxu0 0.0
    %1382 = vmatprep.subr.mxu0 0.0
    %1383 = vmatpush1.msra.mxu0 0.0
    %1384 = vmatprep.subr.mxu0 0.0
    %1385 = vmatpush1.msra.mxu0 0.0
    %1386 = vmatprep.subr.mxu0 0.0
    %1387 = vmatpush1.msra.mxu0 0.0
    %1388 = vmatprep.subr.mxu0 0.0
    %1389 = vmatpush1.msra.mxu0 0.0
    %1390 = vmatprep.subr.mxu0 0.0
    %1391 = vmatpush1.msra.mxu0 0.0
    %1392 = vmatprep.subr.mxu0 0.0
    %1393 = vmatpush1.msra.mxu0 0.0
    %1394 = vmatprep.subr.mxu0 0.0
    %1395 = vmatpush1.msra.mxu0 %v122
    %1396 = vmatprep.subr.mxu0 0.0
    %1397 = vmatpush1.msra.mxu0 %v121
    %1398 = vmatprep.subr.mxu0 0.0
    %1399 = vmatpush1.msra.mxu0 %v120
    %1400 = vmatprep.subr.mxu0 0.0
    %1401 = vmatpush1.msra.mxu0 %v119
    %1402 = vmatprep.subr.mxu0 0.0
    %1403 = vmatpush2.msra.mxu0 0.0
    %1404 = vmatprep.subr.mxu0 0.0
    %1405 = vmatpush2.msra.mxu0 0.0
    %1406 = vmatprep.subr.mxu0 0.0
    %1407 = vmatpush2.msra.mxu0 0.0
    %1408 = vmatprep.subr.mxu0 0.0
    %1409 = vmatpush2.msra.mxu0 0.0
    %1410 = vmatprep.subr.mxu0 0.0
    %1411 = vmatpush2.msra.mxu0 0.0
    %1412 = vmatprep.subr.mxu0 0.0
    %1413 = vmatpush2.msra.mxu0 0.0
    %1414 = vmatprep.subr.mxu0 0.0
    %1415 = vmatpush2.msra.mxu0 0.0
    %1416 = vmatprep.subr.mxu0 0.0
    %1417 = vmatpush2.msra.mxu0 0.0
    %1418 = vmatprep.subr.mxu0 0.0
    %1419 = vmatpush2.msra.mxu0 0.0
    %1420 = vmatprep.subr.mxu0 0.0
    %1421 = vmatpush2.msra.mxu0 0.0
    %1422 = vmatprep.subr.mxu0 0.0
    %1423 = vmatpush2.msra.mxu0 0.0
    %1424 = vmatprep.subr.mxu0 0.0
    %1425 = vmatpush2.msra.mxu0 0.0
    %1426 = vmatprep.subr.mxu0 0.0
    %1427 = vmatpush2.msra.mxu0 0.0
    %1428 = vmatprep.subr.mxu0 0.0
    %1429 = vmatpush2.msra.mxu0 0.0
    %1430 = vmatprep.subr.mxu0 0.0
    %1431 = vmatpush2.msra.mxu0 0.0
    %1432 = vmatprep.subr.mxu0 0.0
    %1433 = vmatpush2.msra.mxu0 0.0
    %1434 = vmatprep.mubr.f32.mxu0 0.0
    %1435 = vmatmul.mubr.f32.gmra.mxu0 %v1368
    %v1436 = vpop.f32.mrf.mxu0
    %v1437 = vadd.f32 0.0, %v1436
    %v1438 = vpop.f32.mrf.mxu0
    %1439 = vdwg.mxu0
    %1441 = vrot.lane.b32.xlu0 %v1257, 32
    %v1442 = vpop.permute.xlu0 %1441
    %v1443 = vsel %vm144, %v1442, 0
    %1445 = vmatprep.subr.mxu0 0.0
    %1446 = vmatpush1.msra.mxu0 0.0
    %1447 = vmatprep.subr.mxu0 0.0
    %1448 = vmatpush1.msra.mxu0 0.0
    %1449 = vmatprep.subr.mxu0 0.0
    %1450 = vmatpush1.msra.mxu0 0.0
    %1451 = vmatprep.subr.mxu0 0.0
    %1452 = vmatpush1.msra.mxu0 0.0
    %1453 = vmatprep.subr.mxu0 0.0
    %1454 = vmatpush1.msra.mxu0 0.0
    %1455 = vmatprep.subr.mxu0 0.0
    %1456 = vmatpush1.msra.mxu0 0.0
    %1457 = vmatprep.subr.mxu0 0.0
    %1458 = vmatpush1.msra.mxu0 0.0
    %1459 = vmatprep.subr.mxu0 0.0
    %1460 = vmatpush1.msra.mxu0 0.0
    %1461 = vmatprep.subr.mxu0 0.0
    %1462 = vmatpush1.msra.mxu0 0.0
    %1463 = vmatprep.subr.mxu0 0.0
    %1464 = vmatpush1.msra.mxu0 0.0
    %1465 = vmatprep.subr.mxu0 0.0
    %1466 = vmatpush1.msra.mxu0 0.0
    %1467 = vmatprep.subr.mxu0 0.0
    %1468 = vmatpush1.msra.mxu0 0.0
    %1469 = vmatprep.subr.mxu0 0.0
    %1470 = vmatpush1.msra.mxu0 %v118
    %1471 = vmatprep.subr.mxu0 0.0
    %1472 = vmatpush1.msra.mxu0 %v117
    %1473 = vmatprep.subr.mxu0 0.0
    %1474 = vmatpush1.msra.mxu0 %v116
    %1475 = vmatprep.subr.mxu0 0.0
    %1476 = vmatpush1.msra.mxu0 %v115
    %1477 = vmatprep.subr.mxu0 0.0
    %1478 = vmatpush2.msra.mxu0 0.0
    %1479 = vmatprep.subr.mxu0 0.0
    %1480 = vmatpush2.msra.mxu0 0.0
    %1481 = vmatprep.subr.mxu0 0.0
    %1482 = vmatpush2.msra.mxu0 0.0
    %1483 = vmatprep.subr.mxu0 0.0
    %1484 = vmatpush2.msra.mxu0 0.0
    %1485 = vmatprep.subr.mxu0 0.0
    %1486 = vmatpush2.msra.mxu0 0.0
    %1487 = vmatprep.subr.mxu0 0.0
    %1488 = vmatpush2.msra.mxu0 0.0
    %1489 = vmatprep.subr.mxu0 0.0
    %1490 = vmatpush2.msra.mxu0 0.0
    %1491 = vmatprep.subr.mxu0 0.0
    %1492 = vmatpush2.msra.mxu0 0.0
    %1493 = vmatprep.subr.mxu0 0.0
    %1494 = vmatpush2.msra.mxu0 0.0
    %1495 = vmatprep.subr.mxu0 0.0
    %1496 = vmatpush2.msra.mxu0 0.0
    %1497 = vmatprep.subr.mxu0 0.0
    %1498 = vmatpush2.msra.mxu0 0.0
    %1499 = vmatprep.subr.mxu0 0.0
    %1500 = vmatpush2.msra.mxu0 0.0
    %1501 = vmatprep.subr.mxu0 0.0
    %1502 = vmatpush2.msra.mxu0 0.0
    %1503 = vmatprep.subr.mxu0 0.0
    %1504 = vmatpush2.msra.mxu0 0.0
    %1505 = vmatprep.subr.mxu0 0.0
    %1506 = vmatpush2.msra.mxu0 0.0
    %1507 = vmatprep.subr.mxu0 0.0
    %1508 = vmatpush2.msra.mxu0 0.0
    %1509 = vmatprep.mubr.f32.mxu0 0.0
    %1510 = vmatmul.mubr.f32.gmra.mxu0 %v1443
    %v1511 = vpop.f32.mrf.mxu0
    %v1512 = vadd.f32 %v1437, %v1511
    %v1513 = vpop.f32.mrf.mxu0
    %1514 = vdwg.mxu0
    %v1515 = vadd.f32 %v1512, %v128
    %v1516 = vxor.u32 %v1515, 2147483648
    %v1517 = vmul.f32 %v1516, 1.442695
    %v1518 = vpow.pop %v1517
    %v1519 = vadd.f32 %v1518, 1.0
    %v1520 = vrcp.pop %v1519
    %v1521 = vmul.f32 1.0, %v1520
    %v1522 = vtanh.pop %v1515
    %v1523 = vmul.f32 %v1521, %v1251
    %1525 = vrot.lane.b32.xlu0 %v1522, 96
    %v1526 = vpop.permute.xlu0 %1525
    %v1528 = vmul.f32 %v1521, %v1526
    %1530 = vrot.lane.b32.xlu0 %v1528, 96
    %v1531 = vpop.permute.xlu0 %1530
    %v1533 = vadd.f32 %v1523, %v1531
    %v1534 = vtanh.pop %v1533
    %1536 = vrot.lane.b32.xlu0 %v1534, 96
    %v1537 = vpop.permute.xlu0 %1536
    %v1539 = vmul.f32 %v1521, %v1537
    %s1540 = sld [smem:[#allocation2 + $0x5]]
    %s1541 = scalar_lea.vmem [#allocation6], %s1540
    %v1542 = vld [vmem:[%s1541] sm:$0x1]
    %s1543 = sld [smem:[#allocation2 + $0x85]]
    %s1544 = scalar_lea.vmem [#allocation6], %s1543
    %v1545 = vld [vmem:[%s1544] sm:$0x1]
    %v1547 = vlaneseq
    %v1548 = vshrl.u32 %v1547, 7
    %v1549 = vsub.s32 0, %v1548
    %v1550 = vrot.slane %v1545, %v1549
    %v1552 = vsel %vm142, %v1542, %v1550
    %1553 = vmatprep.subr.mxu0 0.0
    %1554 = vmatpush1.msra.mxu0 0.0
    %1555 = vmatprep.subr.mxu0 0.0
    %1556 = vmatpush1.msra.mxu0 0.0
    %1557 = vmatprep.subr.mxu0 0.0
    %1558 = vmatpush1.msra.mxu0 0.0
    %1559 = vmatprep.subr.mxu0 0.0
    %1560 = vmatpush1.msra.mxu0 0.0
    %1561 = vmatprep.subr.mxu0 0.0
    %1562 = vmatpush1.msra.mxu0 0.0
    %1563 = vmatprep.subr.mxu0 0.0
    %1564 = vmatpush1.msra.mxu0 0.0
    %1565 = vmatprep.subr.mxu0 0.0
    %1566 = vmatpush1.msra.mxu0 0.0
    %1567 = vmatprep.subr.mxu0 0.0
    %1568 = vmatpush1.msra.mxu0 0.0
    %1569 = vmatprep.subr.mxu0 0.0
    %1570 = vmatpush1.msra.mxu0 0.0
    %1571 = vmatprep.subr.mxu0 0.0
    %1572 = vmatpush1.msra.mxu0 0.0
    %1573 = vmatprep.subr.mxu0 0.0
    %1574 = vmatpush1.msra.mxu0 0.0
    %1575 = vmatprep.subr.mxu0 0.0
    %1576 = vmatpush1.msra.mxu0 0.0
    %1577 = vmatprep.subr.mxu0 0.0
    %1578 = vmatpush1.msra.mxu0 %v114
    %1579 = vmatprep.subr.mxu0 0.0
    %1580 = vmatpush1.msra.mxu0 %v113
    %1581 = vmatprep.subr.mxu0 0.0
    %1582 = vmatpush1.msra.mxu0 %v112
    %1583 = vmatprep.subr.mxu0 0.0
    %1584 = vmatpush1.msra.mxu0 %v111
    %1585 = vmatprep.subr.mxu0 0.0
    %1586 = vmatpush2.msra.mxu0 0.0
    %1587 = vmatprep.subr.mxu0 0.0
    %1588 = vmatpush2.msra.mxu0 0.0
    %1589 = vmatprep.subr.mxu0 0.0
    %1590 = vmatpush2.msra.mxu0 0.0
    %1591 = vmatprep.subr.mxu0 0.0
    %1592 = vmatpush2.msra.mxu0 0.0
    %1593 = vmatprep.subr.mxu0 0.0
    %1594 = vmatpush2.msra.mxu0 0.0
    %1595 = vmatprep.subr.mxu0 0.0
    %1596 = vmatpush2.msra.mxu0 0.0
    %1597 = vmatprep.subr.mxu0 0.0
    %1598 = vmatpush2.msra.mxu0 0.0
    %1599 = vmatprep.subr.mxu0 0.0
    %1600 = vmatpush2.msra.mxu0 0.0
    %1601 = vmatprep.subr.mxu0 0.0
    %1602 = vmatpush2.msra.mxu0 0.0
    %1603 = vmatprep.subr.mxu0 0.0
    %1604 = vmatpush2.msra.mxu0 0.0
    %1605 = vmatprep.subr.mxu0 0.0
    %1606 = vmatpush2.msra.mxu0 0.0
    %1607 = vmatprep.subr.mxu0 0.0
    %1608 = vmatpush2.msra.mxu0 0.0
    %1609 = vmatprep.subr.mxu0 0.0
    %1610 = vmatpush2.msra.mxu0 0.0
    %1611 = vmatprep.subr.mxu0 0.0
    %1612 = vmatpush2.msra.mxu0 0.0
    %1613 = vmatprep.subr.mxu0 0.0
    %1614 = vmatpush2.msra.mxu0 0.0
    %1615 = vmatprep.subr.mxu0 0.0
    %1616 = vmatpush2.msra.mxu0 0.0
    %1617 = vmatprep.mubr.f32.mxu0 0.0
    %1618 = vmatmul.mubr.f32.gmra.mxu0 %v1368
    %v1619 = vpop.f32.mrf.mxu0
    %v1620 = vadd.f32 %v1552, %v1619
    %v1621 = vpop.f32.mrf.mxu0
    %1622 = vdwg.mxu0
    %v1623 = vxor.u32 %v1620, 2147483648
    %v1624 = vmul.f32 %v1623, 1.442695
    %v1625 = vpow.pop %v1624
    %v1626 = vadd.f32 %v1625, 1.0
    %v1627 = vrcp.pop %v1626
    %v1628 = vmul.f32 1.0, %v1627
    %v1629 = vtanh.pop %v1620
    %v1630 = vmul.f32 %v1628, %v1358
    %1632 = vrot.lane.b32.xlu0 %v1629, 96
    %v1633 = vpop.permute.xlu0 %1632
    %v1635 = vmul.f32 %v1628, %v1633
    %1637 = vrot.lane.b32.xlu0 %v1635, 96
    %v1638 = vpop.permute.xlu0 %1637
    %v1640 = vadd.f32 %v1630, %v1638
    %v1641 = vtanh.pop %v1640
    %1643 = vrot.lane.b32.xlu0 %v1641, 96
    %v1644 = vpop.permute.xlu0 %1643
    %v1646 = vmul.f32 %v1628, %v1644
    %1648 = vrot.lane.b32.xlu0 %v1646, 32
    %v1649 = vpop.permute.xlu0 %1648
    %v1650 = vsel %vm144, %v1649, 0
    %1652 = vmatprep.subr.mxu0 0.0
    %1653 = vmatpush1.msra.mxu0 0.0
    %1654 = vmatprep.subr.mxu0 0.0
    %1655 = vmatpush1.msra.mxu0 0.0
    %1656 = vmatprep.subr.mxu0 0.0
    %1657 = vmatpush1.msra.mxu0 0.0
    %1658 = vmatprep.subr.mxu0 0.0
    %1659 = vmatpush1.msra.mxu0 0.0
    %1660 = vmatprep.subr.mxu0 0.0
    %1661 = vmatpush1.msra.mxu0 0.0
    %1662 = vmatprep.subr.mxu0 0.0
    %1663 = vmatpush1.msra.mxu0 0.0
    %1664 = vmatprep.subr.mxu0 0.0
    %1665 = vmatpush1.msra.mxu0 0.0
    %1666 = vmatprep.subr.mxu0 0.0
    %1667 = vmatpush1.msra.mxu0 0.0
    %1668 = vmatprep.subr.mxu0 0.0
    %1669 = vmatpush1.msra.mxu0 0.0
    %1670 = vmatprep.subr.mxu0 0.0
    %1671 = vmatpush1.msra.mxu0 0.0
    %1672 = vmatprep.subr.mxu0 0.0
    %1673 = vmatpush1.msra.mxu0 0.0
    %1674 = vmatprep.subr.mxu0 0.0
    %1675 = vmatpush1.msra.mxu0 0.0
    %1676 = vmatprep.subr.mxu0 0.0
    %1677 = vmatpush1.msra.mxu0 %v122
    %1678 = vmatprep.subr.mxu0 0.0
    %1679 = vmatpush1.msra.mxu0 %v121
    %1680 = vmatprep.subr.mxu0 0.0
    %1681 = vmatpush1.msra.mxu0 %v120
    %1682 = vmatprep.subr.mxu0 0.0
    %1683 = vmatpush1.msra.mxu0 %v119
    %1684 = vmatprep.subr.mxu0 0.0
    %1685 = vmatpush2.msra.mxu0 0.0
    %1686 = vmatprep.subr.mxu0 0.0
    %1687 = vmatpush2.msra.mxu0 0.0
    %1688 = vmatprep.subr.mxu0 0.0
    %1689 = vmatpush2.msra.mxu0 0.0
    %1690 = vmatprep.subr.mxu0 0.0
    %1691 = vmatpush2.msra.mxu0 0.0
    %1692 = vmatprep.subr.mxu0 0.0
    %1693 = vmatpush2.msra.mxu0 0.0
    %1694 = vmatprep.subr.mxu0 0.0
    %1695 = vmatpush2.msra.mxu0 0.0
    %1696 = vmatprep.subr.mxu0 0.0
    %1697 = vmatpush2.msra.mxu0 0.0
    %1698 = vmatprep.subr.mxu0 0.0
    %1699 = vmatpush2.msra.mxu0 0.0
    %1700 = vmatprep.subr.mxu0 0.0
    %1701 = vmatpush2.msra.mxu0 0.0
    %1702 = vmatprep.subr.mxu0 0.0
    %1703 = vmatpush2.msra.mxu0 0.0
    %1704 = vmatprep.subr.mxu0 0.0
    %1705 = vmatpush2.msra.mxu0 0.0
    %1706 = vmatprep.subr.mxu0 0.0
    %1707 = vmatpush2.msra.mxu0 0.0
    %1708 = vmatprep.subr.mxu0 0.0
    %1709 = vmatpush2.msra.mxu0 0.0
    %1710 = vmatprep.subr.mxu0 0.0
    %1711 = vmatpush2.msra.mxu0 0.0
    %1712 = vmatprep.subr.mxu0 0.0
    %1713 = vmatpush2.msra.mxu0 0.0
    %1714 = vmatprep.subr.mxu0 0.0
    %1715 = vmatpush2.msra.mxu0 0.0
    %1716 = vmatprep.mubr.f32.mxu0 0.0
    %1717 = vmatmul.mubr.f32.gmra.mxu0 %v1650
    %v1718 = vpop.f32.mrf.mxu0
    %v1719 = vadd.f32 0.0, %v1718
    %v1720 = vpop.f32.mrf.mxu0
    %1721 = vdwg.mxu0
    %1723 = vrot.lane.b32.xlu0 %v1539, 32
    %v1724 = vpop.permute.xlu0 %1723
    %v1725 = vsel %vm144, %v1724, 0
    %1727 = vmatprep.subr.mxu0 0.0
    %1728 = vmatpush1.msra.mxu0 0.0
    %1729 = vmatprep.subr.mxu0 0.0
    %1730 = vmatpush1.msra.mxu0 0.0
    %1731 = vmatprep.subr.mxu0 0.0
    %1732 = vmatpush1.msra.mxu0 0.0
    %1733 = vmatprep.subr.mxu0 0.0
    %1734 = vmatpush1.msra.mxu0 0.0
    %1735 = vmatprep.subr.mxu0 0.0
    %1736 = vmatpush1.msra.mxu0 0.0
    %1737 = vmatprep.subr.mxu0 0.0
    %1738 = vmatpush1.msra.mxu0 0.0
    %1739 = vmatprep.subr.mxu0 0.0
    %1740 = vmatpush1.msra.mxu0 0.0
    %1741 = vmatprep.subr.mxu0 0.0
    %1742 = vmatpush1.msra.mxu0 0.0
    %1743 = vmatprep.subr.mxu0 0.0
    %1744 = vmatpush1.msra.mxu0 0.0
    %1745 = vmatprep.subr.mxu0 0.0
    %1746 = vmatpush1.msra.mxu0 0.0
    %1747 = vmatprep.subr.mxu0 0.0
    %1748 = vmatpush1.msra.mxu0 0.0
    %1749 = vmatprep.subr.mxu0 0.0
    %1750 = vmatpush1.msra.mxu0 0.0
    %1751 = vmatprep.subr.mxu0 0.0
    %1752 = vmatpush1.msra.mxu0 %v118
    %1753 = vmatprep.subr.mxu0 0.0
    %1754 = vmatpush1.msra.mxu0 %v117
    %1755 = vmatprep.subr.mxu0 0.0
    %1756 = vmatpush1.msra.mxu0 %v116
    %1757 = vmatprep.subr.mxu0 0.0
    %1758 = vmatpush1.msra.mxu0 %v115
    %1759 = vmatprep.subr.mxu0 0.0
    %1760 = vmatpush2.msra.mxu0 0.0
    %1761 = vmatprep.subr.mxu0 0.0
    %1762 = vmatpush2.msra.mxu0 0.0
    %1763 = vmatprep.subr.mxu0 0.0
    %1764 = vmatpush2.msra.mxu0 0.0
    %1765 = vmatprep.subr.mxu0 0.0
    %1766 = vmatpush2.msra.mxu0 0.0
    %1767 = vmatprep.subr.mxu0 0.0
    %1768 = vmatpush2.msra.mxu0 0.0
    %1769 = vmatprep.subr.mxu0 0.0
    %1770 = vmatpush2.msra.mxu0 0.0
    %1771 = vmatprep.subr.mxu0 0.0
    %1772 = vmatpush2.msra.mxu0 0.0
    %1773 = vmatprep.subr.mxu0 0.0
    %1774 = vmatpush2.msra.mxu0 0.0
    %1775 = vmatprep.subr.mxu0 0.0
    %1776 = vmatpush2.msra.mxu0 0.0
    %1777 = vmatprep.subr.mxu0 0.0
    %1778 = vmatpush2.msra.mxu0 0.0
    %1779 = vmatprep.subr.mxu0 0.0
    %1780 = vmatpush2.msra.mxu0 0.0
    %1781 = vmatprep.subr.mxu0 0.0
    %1782 = vmatpush2.msra.mxu0 0.0
    %1783 = vmatprep.subr.mxu0 0.0
    %1784 = vmatpush2.msra.mxu0 0.0
    %1785 = vmatprep.subr.mxu0 0.0
    %1786 = vmatpush2.msra.mxu0 0.0
    %1787 = vmatprep.subr.mxu0 0.0
    %1788 = vmatpush2.msra.mxu0 0.0
    %1789 = vmatprep.subr.mxu0 0.0
    %1790 = vmatpush2.msra.mxu0 0.0
    %1791 = vmatprep.mubr.f32.mxu0 0.0
    %1792 = vmatmul.mubr.f32.gmra.mxu0 %v1725
    %v1793 = vpop.f32.mrf.mxu0
    %v1794 = vadd.f32 %v1719, %v1793
    %v1795 = vpop.f32.mrf.mxu0
    %1796 = vdwg.mxu0
    %v1797 = vadd.f32 %v1794, %v128
    %v1798 = vxor.u32 %v1797, 2147483648
    %v1799 = vmul.f32 %v1798, 1.442695
    %v1800 = vpow.pop %v1799
    %v1801 = vadd.f32 %v1800, 1.0
    %v1802 = vrcp.pop %v1801
    %v1803 = vmul.f32 1.0, %v1802
    %v1804 = vtanh.pop %v1797
    %v1805 = vmul.f32 %v1803, %v1533
    %1807 = vrot.lane.b32.xlu0 %v1804, 96
    %v1808 = vpop.permute.xlu0 %1807
    %v1810 = vmul.f32 %v1803, %v1808
    %1812 = vrot.lane.b32.xlu0 %v1810, 96
    %v1813 = vpop.permute.xlu0 %1812
    %v1815 = vadd.f32 %v1805, %v1813
    %v1816 = vtanh.pop %v1815
    %1818 = vrot.lane.b32.xlu0 %v1816, 96
    %v1819 = vpop.permute.xlu0 %1818
    %v1821 = vmul.f32 %v1803, %v1819
    %s1822 = sld [smem:[#allocation2 + $0x6]]
    %s1823 = scalar_lea.vmem [#allocation6], %s1822
    %v1824 = vld [vmem:[%s1823] sm:$0x1]
    %s1825 = sld [smem:[#allocation2 + $0x86]]
    %s1826 = scalar_lea.vmem [#allocation6], %s1825
    %v1827 = vld [vmem:[%s1826] sm:$0x1]
    %v1829 = vlaneseq
    %v1830 = vshrl.u32 %v1829, 7
    %v1831 = vsub.s32 0, %v1830
    %v1832 = vrot.slane %v1827, %v1831
    %v1834 = vsel %vm142, %v1824, %v1832
    %1835 = vmatprep.subr.mxu0 0.0
    %1836 = vmatpush1.msra.mxu0 0.0
    %1837 = vmatprep.subr.mxu0 0.0
    %1838 = vmatpush1.msra.mxu0 0.0
    %1839 = vmatprep.subr.mxu0 0.0
    %1840 = vmatpush1.msra.mxu0 0.0
    %1841 = vmatprep.subr.mxu0 0.0
    %1842 = vmatpush1.msra.mxu0 0.0
    %1843 = vmatprep.subr.mxu0 0.0
    %1844 = vmatpush1.msra.mxu0 0.0
    %1845 = vmatprep.subr.mxu0 0.0
    %1846 = vmatpush1.msra.mxu0 0.0
    %1847 = vmatprep.subr.mxu0 0.0
    %1848 = vmatpush1.msra.mxu0 0.0
    %1849 = vmatprep.subr.mxu0 0.0
    %1850 = vmatpush1.msra.mxu0 0.0
    %1851 = vmatprep.subr.mxu0 0.0
    %1852 = vmatpush1.msra.mxu0 0.0
    %1853 = vmatprep.subr.mxu0 0.0
    %1854 = vmatpush1.msra.mxu0 0.0
    %1855 = vmatprep.subr.mxu0 0.0
    %1856 = vmatpush1.msra.mxu0 0.0
    %1857 = vmatprep.subr.mxu0 0.0
    %1858 = vmatpush1.msra.mxu0 0.0
    %1859 = vmatprep.subr.mxu0 0.0
    %1860 = vmatpush1.msra.mxu0 %v114
    %1861 = vmatprep.subr.mxu0 0.0
    %1862 = vmatpush1.msra.mxu0 %v113
    %1863 = vmatprep.subr.mxu0 0.0
    %1864 = vmatpush1.msra.mxu0 %v112
    %1865 = vmatprep.subr.mxu0 0.0
    %1866 = vmatpush1.msra.mxu0 %v111
    %1867 = vmatprep.subr.mxu0 0.0
    %1868 = vmatpush2.msra.mxu0 0.0
    %1869 = vmatprep.subr.mxu0 0.0
    %1870 = vmatpush2.msra.mxu0 0.0
    %1871 = vmatprep.subr.mxu0 0.0
    %1872 = vmatpush2.msra.mxu0 0.0
    %1873 = vmatprep.subr.mxu0 0.0
    %1874 = vmatpush2.msra.mxu0 0.0
    %1875 = vmatprep.subr.mxu0 0.0
    %1876 = vmatpush2.msra.mxu0 0.0
    %1877 = vmatprep.subr.mxu0 0.0
    %1878 = vmatpush2.msra.mxu0 0.0
    %1879 = vmatprep.subr.mxu0 0.0
    %1880 = vmatpush2.msra.mxu0 0.0
    %1881 = vmatprep.subr.mxu0 0.0
    %1882 = vmatpush2.msra.mxu0 0.0
    %1883 = vmatprep.subr.mxu0 0.0
    %1884 = vmatpush2.msra.mxu0 0.0
    %1885 = vmatprep.subr.mxu0 0.0
    %1886 = vmatpush2.msra.mxu0 0.0
    %1887 = vmatprep.subr.mxu0 0.0
    %1888 = vmatpush2.msra.mxu0 0.0
    %1889 = vmatprep.subr.mxu0 0.0
    %1890 = vmatpush2.msra.mxu0 0.0
    %1891 = vmatprep.subr.mxu0 0.0
    %1892 = vmatpush2.msra.mxu0 0.0
    %1893 = vmatprep.subr.mxu0 0.0
    %1894 = vmatpush2.msra.mxu0 0.0
    %1895 = vmatprep.subr.mxu0 0.0
    %1896 = vmatpush2.msra.mxu0 0.0
    %1897 = vmatprep.subr.mxu0 0.0
    %1898 = vmatpush2.msra.mxu0 0.0
    %1899 = vmatprep.mubr.f32.mxu0 0.0
    %1900 = vmatmul.mubr.f32.gmra.mxu0 %v1650
    %v1901 = vpop.f32.mrf.mxu0
    %v1902 = vadd.f32 %v1834, %v1901
    %v1903 = vpop.f32.mrf.mxu0
    %1904 = vdwg.mxu0
    %v1905 = vxor.u32 %v1902, 2147483648
    %v1906 = vmul.f32 %v1905, 1.442695
    %v1907 = vpow.pop %v1906
    %v1908 = vadd.f32 %v1907, 1.0
    %v1909 = vrcp.pop %v1908
    %v1910 = vmul.f32 1.0, %v1909
    %v1911 = vtanh.pop %v1902
    %v1912 = vmul.f32 %v1910, %v1640
    %1914 = vrot.lane.b32.xlu0 %v1911, 96
    %v1915 = vpop.permute.xlu0 %1914
    %v1917 = vmul.f32 %v1910, %v1915
    %1919 = vrot.lane.b32.xlu0 %v1917, 96
    %v1920 = vpop.permute.xlu0 %1919
    %v1922 = vadd.f32 %v1912, %v1920
    %v1923 = vtanh.pop %v1922
    %1925 = vrot.lane.b32.xlu0 %v1923, 96
    %v1926 = vpop.permute.xlu0 %1925
    %v1928 = vmul.f32 %v1910, %v1926
    %1930 = vrot.lane.b32.xlu0 %v1928, 32
    %v1931 = vpop.permute.xlu0 %1930
    %v1932 = vsel %vm144, %v1931, 0
    %1934 = vmatprep.subr.mxu0 0.0
    %1935 = vmatpush1.msra.mxu0 0.0
    %1936 = vmatprep.subr.mxu0 0.0
    %1937 = vmatpush1.msra.mxu0 0.0
    %1938 = vmatprep.subr.mxu0 0.0
    %1939 = vmatpush1.msra.mxu0 0.0
    %1940 = vmatprep.subr.mxu0 0.0
    %1941 = vmatpush1.msra.mxu0 0.0
    %1942 = vmatprep.subr.mxu0 0.0
    %1943 = vmatpush1.msra.mxu0 0.0
    %1944 = vmatprep.subr.mxu0 0.0
    %1945 = vmatpush1.msra.mxu0 0.0
    %1946 = vmatprep.subr.mxu0 0.0
    %1947 = vmatpush1.msra.mxu0 0.0
    %1948 = vmatprep.subr.mxu0 0.0
    %1949 = vmatpush1.msra.mxu0 0.0
    %1950 = vmatprep.subr.mxu0 0.0
    %1951 = vmatpush1.msra.mxu0 0.0
    %1952 = vmatprep.subr.mxu0 0.0
    %1953 = vmatpush1.msra.mxu0 0.0
    %1954 = vmatprep.subr.mxu0 0.0
    %1955 = vmatpush1.msra.mxu0 0.0
    %1956 = vmatprep.subr.mxu0 0.0
    %1957 = vmatpush1.msra.mxu0 0.0
    %1958 = vmatprep.subr.mxu0 0.0
    %1959 = vmatpush1.msra.mxu0 %v122
    %1960 = vmatprep.subr.mxu0 0.0
    %1961 = vmatpush1.msra.mxu0 %v121
    %1962 = vmatprep.subr.mxu0 0.0
    %1963 = vmatpush1.msra.mxu0 %v120
    %1964 = vmatprep.subr.mxu0 0.0
    %1965 = vmatpush1.msra.mxu0 %v119
    %1966 = vmatprep.subr.mxu0 0.0
    %1967 = vmatpush2.msra.mxu0 0.0
    %1968 = vmatprep.subr.mxu0 0.0
    %1969 = vmatpush2.msra.mxu0 0.0
    %1970 = vmatprep.subr.mxu0 0.0
    %1971 = vmatpush2.msra.mxu0 0.0
    %1972 = vmatprep.subr.mxu0 0.0
    %1973 = vmatpush2.msra.mxu0 0.0
    %1974 = vmatprep.subr.mxu0 0.0
    %1975 = vmatpush2.msra.mxu0 0.0
    %1976 = vmatprep.subr.mxu0 0.0
    %1977 = vmatpush2.msra.mxu0 0.0
    %1978 = vmatprep.subr.mxu0 0.0
    %1979 = vmatpush2.msra.mxu0 0.0
    %1980 = vmatprep.subr.mxu0 0.0
    %1981 = vmatpush2.msra.mxu0 0.0
    %1982 = vmatprep.subr.mxu0 0.0
    %1983 = vmatpush2.msra.mxu0 0.0
    %1984 = vmatprep.subr.mxu0 0.0
    %1985 = vmatpush2.msra.mxu0 0.0
    %1986 = vmatprep.subr.mxu0 0.0
    %1987 = vmatpush2.msra.mxu0 0.0
    %1988 = vmatprep.subr.mxu0 0.0
    %1989 = vmatpush2.msra.mxu0 0.0
    %1990 = vmatprep.subr.mxu0 0.0
    %1991 = vmatpush2.msra.mxu0 0.0
    %1992 = vmatprep.subr.mxu0 0.0
    %1993 = vmatpush2.msra.mxu0 0.0
    %1994 = vmatprep.subr.mxu0 0.0
    %1995 = vmatpush2.msra.mxu0 0.0
    %1996 = vmatprep.subr.mxu0 0.0
    %1997 = vmatpush2.msra.mxu0 0.0
    %1998 = vmatprep.mubr.f32.mxu0 0.0
    %1999 = vmatmul.mubr.f32.gmra.mxu0 %v1932
    %v2000 = vpop.f32.mrf.mxu0
    %v2001 = vadd.f32 0.0, %v2000
    %v2002 = vpop.f32.mrf.mxu0
    %2003 = vdwg.mxu0
    %2005 = vrot.lane.b32.xlu0 %v1821, 32
    %v2006 = vpop.permute.xlu0 %2005
    %v2007 = vsel %vm144, %v2006, 0
    %2009 = vmatprep.subr.mxu0 0.0
    %2010 = vmatpush1.msra.mxu0 0.0
    %2011 = vmatprep.subr.mxu0 0.0
    %2012 = vmatpush1.msra.mxu0 0.0
    %2013 = vmatprep.subr.mxu0 0.0
    %2014 = vmatpush1.msra.mxu0 0.0
    %2015 = vmatprep.subr.mxu0 0.0
    %2016 = vmatpush1.msra.mxu0 0.0
    %2017 = vmatprep.subr.mxu0 0.0
    %2018 = vmatpush1.msra.mxu0 0.0
    %2019 = vmatprep.subr.mxu0 0.0
    %2020 = vmatpush1.msra.mxu0 0.0
    %2021 = vmatprep.subr.mxu0 0.0
    %2022 = vmatpush1.msra.mxu0 0.0
    %2023 = vmatprep.subr.mxu0 0.0
    %2024 = vmatpush1.msra.mxu0 0.0
    %2025 = vmatprep.subr.mxu0 0.0
    %2026 = vmatpush1.msra.mxu0 0.0
    %2027 = vmatprep.subr.mxu0 0.0
    %2028 = vmatpush1.msra.mxu0 0.0
    %2029 = vmatprep.subr.mxu0 0.0
    %2030 = vmatpush1.msra.mxu0 0.0
    %2031 = vmatprep.subr.mxu0 0.0
    %2032 = vmatpush1.msra.mxu0 0.0
    %2033 = vmatprep.subr.mxu0 0.0
    %2034 = vmatpush1.msra.mxu0 %v118
    %2035 = vmatprep.subr.mxu0 0.0
    %2036 = vmatpush1.msra.mxu0 %v117
    %2037 = vmatprep.subr.mxu0 0.0
    %2038 = vmatpush1.msra.mxu0 %v116
    %2039 = vmatprep.subr.mxu0 0.0
    %2040 = vmatpush1.msra.mxu0 %v115
    %2041 = vmatprep.subr.mxu0 0.0
    %2042 = vmatpush2.msra.mxu0 0.0
    %2043 = vmatprep.subr.mxu0 0.0
    %2044 = vmatpush2.msra.mxu0 0.0
    %2045 = vmatprep.subr.mxu0 0.0
    %2046 = vmatpush2.msra.mxu0 0.0
    %2047 = vmatprep.subr.mxu0 0.0
    %2048 = vmatpush2.msra.mxu0 0.0
    %2049 = vmatprep.subr.mxu0 0.0
    %2050 = vmatpush2.msra.mxu0 0.0
    %2051 = vmatprep.subr.mxu0 0.0
    %2052 = vmatpush2.msra.mxu0 0.0
    %2053 = vmatprep.subr.mxu0 0.0
    %2054 = vmatpush2.msra.mxu0 0.0
    %2055 = vmatprep.subr.mxu0 0.0
    %2056 = vmatpush2.msra.mxu0 0.0
    %2057 = vmatprep.subr.mxu0 0.0
    %2058 = vmatpush2.msra.mxu0 0.0
    %2059 = vmatprep.subr.mxu0 0.0
    %2060 = vmatpush2.msra.mxu0 0.0
    %2061 = vmatprep.subr.mxu0 0.0
    %2062 = vmatpush2.msra.mxu0 0.0
    %2063 = vmatprep.subr.mxu0 0.0
    %2064 = vmatpush2.msra.mxu0 0.0
    %2065 = vmatprep.subr.mxu0 0.0
    %2066 = vmatpush2.msra.mxu0 0.0
    %2067 = vmatprep.subr.mxu0 0.0
    %2068 = vmatpush2.msra.mxu0 0.0
    %2069 = vmatprep.subr.mxu0 0.0
    %2070 = vmatpush2.msra.mxu0 0.0
    %2071 = vmatprep.subr.mxu0 0.0
    %2072 = vmatpush2.msra.mxu0 0.0
    %2073 = vmatprep.mubr.f32.mxu0 0.0
    %2074 = vmatmul.mubr.f32.gmra.mxu0 %v2007
    %v2075 = vpop.f32.mrf.mxu0
    %v2076 = vadd.f32 %v2001, %v2075
    %v2077 = vpop.f32.mrf.mxu0
    %2078 = vdwg.mxu0
    %v2079 = vadd.f32 %v2076, %v128
    %v2080 = vxor.u32 %v2079, 2147483648
    %v2081 = vmul.f32 %v2080, 1.442695
    %v2082 = vpow.pop %v2081
    %v2083 = vadd.f32 %v2082, 1.0
    %v2084 = vrcp.pop %v2083
    %v2085 = vmul.f32 1.0, %v2084
    %v2086 = vtanh.pop %v2079
    %v2087 = vmul.f32 %v2085, %v1815
    %2089 = vrot.lane.b32.xlu0 %v2086, 96
    %v2090 = vpop.permute.xlu0 %2089
    %v2092 = vmul.f32 %v2085, %v2090
    %2094 = vrot.lane.b32.xlu0 %v2092, 96
    %v2095 = vpop.permute.xlu0 %2094
    %v2097 = vadd.f32 %v2087, %v2095
    %v2098 = vtanh.pop %v2097
    %2100 = vrot.lane.b32.xlu0 %v2098, 96
    %v2101 = vpop.permute.xlu0 %2100
    %v2103 = vmul.f32 %v2085, %v2101
    %s2104 = sld [smem:[#allocation2 + $0x7]]
    %s2105 = scalar_lea.vmem [#allocation6], %s2104
    %v2106 = vld [vmem:[%s2105] sm:$0x1]
    %s2107 = sld [smem:[#allocation2 + $0x87]]
    %s2108 = scalar_lea.vmem [#allocation6], %s2107
    %v2109 = vld [vmem:[%s2108] sm:$0x1]
    %v2111 = vlaneseq
    %v2112 = vshrl.u32 %v2111, 7
    %v2113 = vsub.s32 0, %v2112
    %v2114 = vrot.slane %v2109, %v2113
    %v2116 = vsel %vm142, %v2106, %v2114
    %2117 = vmatprep.subr.mxu0 0.0
    %2118 = vmatpush1.msra.mxu0 0.0
    %2119 = vmatprep.subr.mxu0 0.0
    %2120 = vmatpush1.msra.mxu0 0.0
    %2121 = vmatprep.subr.mxu0 0.0
    %2122 = vmatpush1.msra.mxu0 0.0
    %2123 = vmatprep.subr.mxu0 0.0
    %2124 = vmatpush1.msra.mxu0 0.0
    %2125 = vmatprep.subr.mxu0 0.0
    %2126 = vmatpush1.msra.mxu0 0.0
    %2127 = vmatprep.subr.mxu0 0.0
    %2128 = vmatpush1.msra.mxu0 0.0
    %2129 = vmatprep.subr.mxu0 0.0
    %2130 = vmatpush1.msra.mxu0 0.0
    %2131 = vmatprep.subr.mxu0 0.0
    %2132 = vmatpush1.msra.mxu0 0.0
    %2133 = vmatprep.subr.mxu0 0.0
    %2134 = vmatpush1.msra.mxu0 0.0
    %2135 = vmatprep.subr.mxu0 0.0
    %2136 = vmatpush1.msra.mxu0 0.0
    %2137 = vmatprep.subr.mxu0 0.0
    %2138 = vmatpush1.msra.mxu0 0.0
    %2139 = vmatprep.subr.mxu0 0.0
    %2140 = vmatpush1.msra.mxu0 0.0
    %2141 = vmatprep.subr.mxu0 0.0
    %2142 = vmatpush1.msra.mxu0 %v114
    %2143 = vmatprep.subr.mxu0 0.0
    %2144 = vmatpush1.msra.mxu0 %v113
    %2145 = vmatprep.subr.mxu0 0.0
    %2146 = vmatpush1.msra.mxu0 %v112
    %2147 = vmatprep.subr.mxu0 0.0
    %2148 = vmatpush1.msra.mxu0 %v111
    %2149 = vmatprep.subr.mxu0 0.0
    %2150 = vmatpush2.msra.mxu0 0.0
    %2151 = vmatprep.subr.mxu0 0.0
    %2152 = vmatpush2.msra.mxu0 0.0
    %2153 = vmatprep.subr.mxu0 0.0
    %2154 = vmatpush2.msra.mxu0 0.0
    %2155 = vmatprep.subr.mxu0 0.0
    %2156 = vmatpush2.msra.mxu0 0.0
    %2157 = vmatprep.subr.mxu0 0.0
    %2158 = vmatpush2.msra.mxu0 0.0
    %2159 = vmatprep.subr.mxu0 0.0
    %2160 = vmatpush2.msra.mxu0 0.0
    %2161 = vmatprep.subr.mxu0 0.0
    %2162 = vmatpush2.msra.mxu0 0.0
    %2163 = vmatprep.subr.mxu0 0.0
    %2164 = vmatpush2.msra.mxu0 0.0
    %2165 = vmatprep.subr.mxu0 0.0
    %2166 = vmatpush2.msra.mxu0 0.0
    %2167 = vmatprep.subr.mxu0 0.0
    %2168 = vmatpush2.msra.mxu0 0.0
    %2169 = vmatprep.subr.mxu0 0.0
    %2170 = vmatpush2.msra.mxu0 0.0
    %2171 = vmatprep.subr.mxu0 0.0
    %2172 = vmatpush2.msra.mxu0 0.0
    %2173 = vmatprep.subr.mxu0 0.0
    %2174 = vmatpush2.msra.mxu0 0.0
    %2175 = vmatprep.subr.mxu0 0.0
    %2176 = vmatpush2.msra.mxu0 0.0
    %2177 = vmatprep.subr.mxu0 0.0
    %2178 = vmatpush2.msra.mxu0 0.0
    %2179 = vmatprep.subr.mxu0 0.0
    %2180 = vmatpush2.msra.mxu0 0.0
    %2181 = vmatprep.mubr.f32.mxu0 0.0
    %2182 = vmatmul.mubr.f32.gmra.mxu0 %v1932
    %v2183 = vpop.f32.mrf.mxu0
    %v2184 = vadd.f32 %v2116, %v2183
    %v2185 = vpop.f32.mrf.mxu0
    %2186 = vdwg.mxu0
    %v2187 = vxor.u32 %v2184, 2147483648
    %v2188 = vmul.f32 %v2187, 1.442695
    %v2189 = vpow.pop %v2188
    %v2190 = vadd.f32 %v2189, 1.0
    %v2191 = vrcp.pop %v2190
    %v2192 = vmul.f32 1.0, %v2191
    %v2193 = vtanh.pop %v2184
    %v2194 = vmul.f32 %v2192, %v1922
    %2196 = vrot.lane.b32.xlu0 %v2193, 96
    %v2197 = vpop.permute.xlu0 %2196
    %v2199 = vmul.f32 %v2192, %v2197
    %2201 = vrot.lane.b32.xlu0 %v2199, 96
    %v2202 = vpop.permute.xlu0 %2201
    %v2204 = vadd.f32 %v2194, %v2202
    %v2205 = vtanh.pop %v2204
    %2207 = vrot.lane.b32.xlu0 %v2205, 96
    %v2208 = vpop.permute.xlu0 %2207
    %v2210 = vmul.f32 %v2192, %v2208
    %2212 = vrot.lane.b32.xlu0 %v2210, 32
    %v2213 = vpop.permute.xlu0 %2212
    %v2214 = vsel %vm144, %v2213, 0
    %2216 = vmatprep.subr.mxu0 0.0
    %2217 = vmatpush1.msra.mxu0 0.0
    %2218 = vmatprep.subr.mxu0 0.0
    %2219 = vmatpush1.msra.mxu0 0.0
    %2220 = vmatprep.subr.mxu0 0.0
    %2221 = vmatpush1.msra.mxu0 0.0
    %2222 = vmatprep.subr.mxu0 0.0
    %2223 = vmatpush1.msra.mxu0 0.0
    %2224 = vmatprep.subr.mxu0 0.0
    %2225 = vmatpush1.msra.mxu0 0.0
    %2226 = vmatprep.subr.mxu0 0.0
    %2227 = vmatpush1.msra.mxu0 0.0
    %2228 = vmatprep.subr.mxu0 0.0
    %2229 = vmatpush1.msra.mxu0 0.0
    %2230 = vmatprep.subr.mxu0 0.0
    %2231 = vmatpush1.msra.mxu0 0.0
    %2232 = vmatprep.subr.mxu0 0.0
    %2233 = vmatpush1.msra.mxu0 0.0
    %2234 = vmatprep.subr.mxu0 0.0
    %2235 = vmatpush1.msra.mxu0 0.0
    %2236 = vmatprep.subr.mxu0 0.0
    %2237 = vmatpush1.msra.mxu0 0.0
    %2238 = vmatprep.subr.mxu0 0.0
    %2239 = vmatpush1.msra.mxu0 0.0
    %2240 = vmatprep.subr.mxu0 0.0
    %2241 = vmatpush1.msra.mxu0 %v122
    %2242 = vmatprep.subr.mxu0 0.0
    %2243 = vmatpush1.msra.mxu0 %v121
    %2244 = vmatprep.subr.mxu0 0.0
    %2245 = vmatpush1.msra.mxu0 %v120
    %2246 = vmatprep.subr.mxu0 0.0
    %2247 = vmatpush1.msra.mxu0 %v119
    %2248 = vmatprep.subr.mxu0 0.0
    %2249 = vmatpush2.msra.mxu0 0.0
    %2250 = vmatprep.subr.mxu0 0.0
    %2251 = vmatpush2.msra.mxu0 0.0
    %2252 = vmatprep.subr.mxu0 0.0
    %2253 = vmatpush2.msra.mxu0 0.0
    %2254 = vmatprep.subr.mxu0 0.0
    %2255 = vmatpush2.msra.mxu0 0.0
    %2256 = vmatprep.subr.mxu0 0.0
    %2257 = vmatpush2.msra.mxu0 0.0
    %2258 = vmatprep.subr.mxu0 0.0
    %2259 = vmatpush2.msra.mxu0 0.0
    %2260 = vmatprep.subr.mxu0 0.0
    %2261 = vmatpush2.msra.mxu0 0.0
    %2262 = vmatprep.subr.mxu0 0.0
    %2263 = vmatpush2.msra.mxu0 0.0
    %2264 = vmatprep.subr.mxu0 0.0
    %2265 = vmatpush2.msra.mxu0 0.0
    %2266 = vmatprep.subr.mxu0 0.0
    %2267 = vmatpush2.msra.mxu0 0.0
    %2268 = vmatprep.subr.mxu0 0.0
    %2269 = vmatpush2.msra.mxu0 0.0
    %2270 = vmatprep.subr.mxu0 0.0
    %2271 = vmatpush2.msra.mxu0 0.0
    %2272 = vmatprep.subr.mxu0 0.0
    %2273 = vmatpush2.msra.mxu0 0.0
    %2274 = vmatprep.subr.mxu0 0.0
    %2275 = vmatpush2.msra.mxu0 0.0
    %2276 = vmatprep.subr.mxu0 0.0
    %2277 = vmatpush2.msra.mxu0 0.0
    %2278 = vmatprep.subr.mxu0 0.0
    %2279 = vmatpush2.msra.mxu0 0.0
    %2280 = vmatprep.mubr.f32.mxu0 0.0
    %2281 = vmatmul.mubr.f32.gmra.mxu0 %v2214
    %v2282 = vpop.f32.mrf.mxu0
    %v2283 = vadd.f32 0.0, %v2282
    %v2284 = vpop.f32.mrf.mxu0
    %2285 = vdwg.mxu0
    %2287 = vrot.lane.b32.xlu0 %v2103, 32
    %v2288 = vpop.permute.xlu0 %2287
    %v2289 = vsel %vm144, %v2288, 0
    %2291 = vmatprep.subr.mxu0 0.0
    %2292 = vmatpush1.msra.mxu0 0.0
    %2293 = vmatprep.subr.mxu0 0.0
    %2294 = vmatpush1.msra.mxu0 0.0
    %2295 = vmatprep.subr.mxu0 0.0
    %2296 = vmatpush1.msra.mxu0 0.0
    %2297 = vmatprep.subr.mxu0 0.0
    %2298 = vmatpush1.msra.mxu0 0.0
    %2299 = vmatprep.subr.mxu0 0.0
    %2300 = vmatpush1.msra.mxu0 0.0
    %2301 = vmatprep.subr.mxu0 0.0
    %2302 = vmatpush1.msra.mxu0 0.0
    %2303 = vmatprep.subr.mxu0 0.0
    %2304 = vmatpush1.msra.mxu0 0.0
    %2305 = vmatprep.subr.mxu0 0.0
    %2306 = vmatpush1.msra.mxu0 0.0
    %2307 = vmatprep.subr.mxu0 0.0
    %2308 = vmatpush1.msra.mxu0 0.0
    %2309 = vmatprep.subr.mxu0 0.0
    %2310 = vmatpush1.msra.mxu0 0.0
    %2311 = vmatprep.subr.mxu0 0.0
    %2312 = vmatpush1.msra.mxu0 0.0
    %2313 = vmatprep.subr.mxu0 0.0
    %2314 = vmatpush1.msra.mxu0 0.0
    %2315 = vmatprep.subr.mxu0 0.0
    %2316 = vmatpush1.msra.mxu0 %v118
    %2317 = vmatprep.subr.mxu0 0.0
    %2318 = vmatpush1.msra.mxu0 %v117
    %2319 = vmatprep.subr.mxu0 0.0
    %2320 = vmatpush1.msra.mxu0 %v116
    %2321 = vmatprep.subr.mxu0 0.0
    %2322 = vmatpush1.msra.mxu0 %v115
    %2323 = vmatprep.subr.mxu0 0.0
    %2324 = vmatpush2.msra.mxu0 0.0
    %2325 = vmatprep.subr.mxu0 0.0
    %2326 = vmatpush2.msra.mxu0 0.0
    %2327 = vmatprep.subr.mxu0 0.0
    %2328 = vmatpush2.msra.mxu0 0.0
    %2329 = vmatprep.subr.mxu0 0.0
    %2330 = vmatpush2.msra.mxu0 0.0
    %2331 = vmatprep.subr.mxu0 0.0
    %2332 = vmatpush2.msra.mxu0 0.0
    %2333 = vmatprep.subr.mxu0 0.0
    %2334 = vmatpush2.msra.mxu0 0.0
    %2335 = vmatprep.subr.mxu0 0.0
    %2336 = vmatpush2.msra.mxu0 0.0
    %2337 = vmatprep.subr.mxu0 0.0
    %2338 = vmatpush2.msra.mxu0 0.0
    %2339 = vmatprep.subr.mxu0 0.0
    %2340 = vmatpush2.msra.mxu0 0.0
    %2341 = vmatprep.subr.mxu0 0.0
    %2342 = vmatpush2.msra.mxu0 0.0
    %2343 = vmatprep.subr.mxu0 0.0
    %2344 = vmatpush2.msra.mxu0 0.0
    %2345 = vmatprep.subr.mxu0 0.0
    %2346 = vmatpush2.msra.mxu0 0.0
    %2347 = vmatprep.subr.mxu0 0.0
    %2348 = vmatpush2.msra.mxu0 0.0
    %2349 = vmatprep.subr.mxu0 0.0
    %2350 = vmatpush2.msra.mxu0 0.0
    %2351 = vmatprep.subr.mxu0 0.0
    %2352 = vmatpush2.msra.mxu0 0.0
    %2353 = vmatprep.subr.mxu0 0.0
    %2354 = vmatpush2.msra.mxu0 0.0
    %2355 = vmatprep.mubr.f32.mxu0 0.0
    %2356 = vmatmul.mubr.f32.gmra.mxu0 %v2289
    %v2357 = vpop.f32.mrf.mxu0
    %v2358 = vadd.f32 %v2283, %v2357
    %v2359 = vpop.f32.mrf.mxu0
    %2360 = vdwg.mxu0
    %v2361 = vadd.f32 %v2358, %v128
    %v2362 = vxor.u32 %v2361, 2147483648
    %v2363 = vmul.f32 %v2362, 1.442695
    %v2364 = vpow.pop %v2363
    %v2365 = vadd.f32 %v2364, 1.0
    %v2366 = vrcp.pop %v2365
    %v2367 = vmul.f32 1.0, %v2366
    %v2368 = vtanh.pop %v2361
    %v2369 = vmul.f32 %v2367, %v2097
    %2371 = vrot.lane.b32.xlu0 %v2368, 96
    %v2372 = vpop.permute.xlu0 %2371
    %v2374 = vmul.f32 %v2367, %v2372
    %2376 = vrot.lane.b32.xlu0 %v2374, 96
    %v2377 = vpop.permute.xlu0 %2376
    %v2379 = vadd.f32 %v2369, %v2377
    %v2380 = vtanh.pop %v2379
    %2382 = vrot.lane.b32.xlu0 %v2380, 96
    %v2383 = vpop.permute.xlu0 %2382
    %v2385 = vmul.f32 %v2367, %v2383
    %v2386 = vld [vmem:[#allocation12] sm:$0xff]
    %v2387 = vld [vmem:[#allocation12 + $0x8] sm:$0xff]
    %v2388 = vld [vmem:[#allocation12 + $0x10] sm:$0xff]
    %v2389 = vld [vmem:[#allocation12 + $0x18] sm:$0xff]
    %v2390 = vld [vmem:[%s7] sm:$0x1]
    %v2392 = vlaneseq
    %v2393 = vshrl.u32 %v2392, 7
    %v2394 = vsub.s32 0, %v2393
    %v2395 = vrot.slane %v2390, %v2394
    %2398 = vrot.lane.b32.xlu0 %v2385, 32
    %v2399 = vpop.permute.xlu0 %2398
    %v2400 = vsel %vm144, %v2399, 0
    %2402 = vmatprep.subr.mxu0 0.0
    %2403 = vmatpush1.msra.mxu0 0.0
    %2404 = vmatprep.subr.mxu0 0.0
    %2405 = vmatpush1.msra.mxu0 0.0
    %2406 = vmatprep.subr.mxu0 0.0
    %2407 = vmatpush1.msra.mxu0 0.0
    %2408 = vmatprep.subr.mxu0 0.0
    %2409 = vmatpush1.msra.mxu0 0.0
    %2410 = vmatprep.subr.mxu0 0.0
    %2411 = vmatpush1.msra.mxu0 0.0
    %2412 = vmatprep.subr.mxu0 0.0
    %2413 = vmatpush1.msra.mxu0 0.0
    %2414 = vmatprep.subr.mxu0 0.0
    %2415 = vmatpush1.msra.mxu0 0.0
    %2416 = vmatprep.subr.mxu0 0.0
    %2417 = vmatpush1.msra.mxu0 0.0
    %2418 = vmatprep.subr.mxu0 0.0
    %2419 = vmatpush1.msra.mxu0 0.0
    %2420 = vmatprep.subr.mxu0 0.0
    %2421 = vmatpush1.msra.mxu0 0.0
    %2422 = vmatprep.subr.mxu0 0.0
    %2423 = vmatpush1.msra.mxu0 0.0
    %2424 = vmatprep.subr.mxu0 0.0
    %2425 = vmatpush1.msra.mxu0 0.0
    %2426 = vmatprep.subr.mxu0 0.0
    %2427 = vmatpush1.msra.mxu0 %v2389
    %2428 = vmatprep.subr.mxu0 0.0
    %2429 = vmatpush1.msra.mxu0 %v2388
    %2430 = vmatprep.subr.mxu0 0.0
    %2431 = vmatpush1.msra.mxu0 %v2387
    %2432 = vmatprep.subr.mxu0 0.0
    %2433 = vmatpush1.msra.mxu0 %v2386
    %2434 = vmatprep.subr.mxu0 0.0
    %2435 = vmatpush2.msra.mxu0 0.0
    %2436 = vmatprep.subr.mxu0 0.0
    %2437 = vmatpush2.msra.mxu0 0.0
    %2438 = vmatprep.subr.mxu0 0.0
    %2439 = vmatpush2.msra.mxu0 0.0
    %2440 = vmatprep.subr.mxu0 0.0
    %2441 = vmatpush2.msra.mxu0 0.0
    %2442 = vmatprep.subr.mxu0 0.0
    %2443 = vmatpush2.msra.mxu0 0.0
    %2444 = vmatprep.subr.mxu0 0.0
    %2445 = vmatpush2.msra.mxu0 0.0
    %2446 = vmatprep.subr.mxu0 0.0
    %2447 = vmatpush2.msra.mxu0 0.0
    %2448 = vmatprep.subr.mxu0 0.0
    %2449 = vmatpush2.msra.mxu0 0.0
    %2450 = vmatprep.subr.mxu0 0.0
    %2451 = vmatpush2.msra.mxu0 0.0
    %2452 = vmatprep.subr.mxu0 0.0
    %2453 = vmatpush2.msra.mxu0 0.0
    %2454 = vmatprep.subr.mxu0 0.0
    %2455 = vmatpush2.msra.mxu0 0.0
    %2456 = vmatprep.subr.mxu0 0.0
    %2457 = vmatpush2.msra.mxu0 0.0
    %2458 = vmatprep.subr.mxu0 0.0
    %2459 = vmatpush2.msra.mxu0 0.0
    %2460 = vmatprep.subr.mxu0 0.0
    %2461 = vmatpush2.msra.mxu0 0.0
    %2462 = vmatprep.subr.mxu0 0.0
    %2463 = vmatpush2.msra.mxu0 0.0
    %2464 = vmatprep.subr.mxu0 0.0
    %2465 = vmatpush2.msra.mxu0 0.0
    %2466 = vmatprep.mubr.f32.mxu0 0.0
    %2467 = vmatmul.mubr.f32.gmra.mxu0 %v2400
    %v2468 = vpop.f32.mrf.mxu0
    %v2469 = vadd.f32 %v2395, %v2468
    %v2470 = vpop.f32.mrf.mxu0
    %2471 = vdwg.mxu0
    %vm2472 = vcmask 254976
    %2473 = vst.msk [vmem:[#allocation13] sm:$0x3] %vm2472, %v2469
    %2475 = vrot.lane.b32.xlu0 %v2385, 64
    %v2476 = vpop.permute.xlu0 %2475
    %2479 = vrot.lane.b32.xlu0 %v2204, 64
    %v2480 = vpop.permute.xlu0 %2479
    %2483 = vrot.lane.b32.xlu0 %v2379, 96
    %v2484 = vpop.permute.xlu0 %2483
    %v2486 = vsel %vm144, %v2213, %v2476
    %vm2487 = vcmask 523264
    %v2488 = vsel %vm2487, %v2486, %v2480
    %vm2489 = vcmask 785408
    %v2490 = vsel %vm2489, %v2488, %v2484
    %2491 = vst [vmem:[%s9] sm:$0x3] %v2490
    // Predicated region
    $region58: #{lstm_double_forward.1} parent=1 // pred_check
      _
    $region59: #{lstm_double_forward.1} parent=1 // pred_check_branch
      %2493 = sbr.rel (0) target = $region61
    $region60: #{lstm_double_forward.1} parent=1 // pred_region
      %s2495 = ssub.s32 32, 32
      %2496 = vsyncadd [#allocation4], %s2495
      %s2498 = sshll.u32 [#allocation13], 4
      %s2499 = int_to_ptr.vmem [resolvable:$true] %s2498
      %2501 = dma.vmem_to_hbm [thread:$0]  %s2499, 32, %s8, [#allocation4]
    $region61: #{lstm_double_forward.1} parent=1 // pred_fallthru
      _
    // Predicated region
    $region62: #{lstm_double_forward.1} parent=1 // pred_check
      _
    $region63: #{lstm_double_forward.1} parent=1 // pred_check_branch
      %2503 = sbr.rel (0) target = $region65
    $region64: #{lstm_double_forward.1} parent=1 // pred_region
      _
    $region65: #{lstm_double_forward.1} parent=1 // pred_fallthru
      _
    // Predicated region
    $region66: #{lstm_double_forward.1} parent=1 // pred_check
      _
    $region67: #{lstm_double_forward.1} parent=1 // pred_check_branch
      %2505 = sbr.rel (0) target = $region69
    $region68: #{lstm_double_forward.1} parent=1 // pred_region
      %2506 = dma.done [#allocation4], 32
    $region69: #{lstm_double_forward.1} parent=1 // pred_fallthru
      _
    // Predicated region
    $region70: #{lstm_double_forward.1} parent=1 // pred_check
      _
    $region71: #{lstm_double_forward.1} parent=1 // pred_check_branch
      %2508 = sbr.rel (0) target = $region73
    $region72: #{lstm_double_forward.1} parent=1 // pred_region
      _
    $region73: #{lstm_double_forward.1} parent=1 // pred_fallthru
      _
    %2509 = vsyncpa [#allocation3], 1
    %2510 = vsyncpa [#allocation8], 1
    %2511 = vsyncpa [#allocation11], 1
    %2512 = vsyncpa [#allocation4], 1
    %2513 = vsyncpa [#allocation5], 1

</llo_original>
